<compile_context>
chip_gen: v7x
topology: tpu7x:2x2x1
jax: 0.10.0
libtpu: 0.0.40
codegen_flags: <defaults>
</compile_context>

<pallas_src>
import functools

import numpy as np
import jax
import jax.numpy as jnp
from jax.experimental import pallas as pl
from jax.experimental.pallas import tpu as pltpu

# Rows of 128 lanes per grid step -> ROWS_TILE * 128 pairs per tile.
# Sweepable; larger tiles amortize the ~0.35us per-step overhead but also set
# the per-molecule padding granularity and should keep >=2 grid steps so the
# second v7x TensorCore stays busy.  64 rows = 8192 pairs, ~0.7 MiB
# double-buffered footprint (well inside scoped VMEM on v5e/v6e/v7x).
ROWS_TILE = 64
TILE_PAIRS = ROWS_TILE * 128


# ----------------------------------------------------------------------------
# Pallas kernel: per-pair hot path (one molecule per grid step)
#   pair_offsets = offsets @ cell[mol]        (torch.bmm)
#   paircoord    = coord[pair_first] - coord[pair_second] + pair_offsets
#   distflat2    = ||paircoord||_2
# ----------------------------------------------------------------------------
def _pair_kernel(tile_mol_ref, cell_ref, f_ref, pk_ref, out_ref):
    # tile_mol_ref : SMEM (num_tiles,) i32   molecule id owning this tile
    # cell_ref     : SMEM (n_mol*9,)  f32    cell_flat[9*m + 3*i + j] = cell[m,i,j]
    # f_ref        : VMEM (6, R, 128) f32    rows 0-2 coord_first, rows 3-5 coord_second
    # pk_ref       : VMEM (1, R, 128) i32    byte-packed offsets: (o0+128)|((o1+128)<<8)|((o2+128)<<16)
    # out_ref      : VMEM (4, R, 128) f32    rows 0-2 paircoord, row 3 dist
    t = pl.program_id(0)
    base = tile_mol_ref[t] * 9  # start of this molecule's 3x3 cell in SMEM

    pk = pk_ref[0]  # (R, 128) int32
    o = [(((pk >> (8 * k)) & 255) - 128).astype(jnp.float32) for k in range(3)]

    sq = None
    for j in range(3):
        # po_j = sum_i offsets_i * cell[m, i, j]  (cell entries are SMEM scalars)
        po_j = (o[0] * cell_ref[base + j]
                + o[1] * cell_ref[base + 3 + j]
                + o[2] * cell_ref[base + 6 + j])
        pc_j = f_ref[j] - f_ref[3 + j] + po_j
        out_ref[j] = pc_j
        sq = pc_j * pc_j if sq is None else sq + pc_j * pc_j
    out_ref[3] = jnp.sqrt(sq)


@functools.partial(jax.jit, static_argnames=("p_pad", "num_tiles"))
def _pair_math_device(coordinates, real_atoms, pair_first_p, pair_second_p,
                      packed_off_p, tile_mol, cell, offsets, out_pos, n_images,
                      *, p_pad, num_tiles):
    """All device work for the hot path under one jit.

    coordinates: [n_mol, n_atoms_max, 3] f32; real_atoms: [A] i32
    pair_first_p/pair_second_p/packed_off_p: padded, molecule-tile-aligned [p_pad]
    tile_mol: [num_tiles] i32; cell: [n_mol,3,3] f32
    offsets: [P,3] i32 (original order); out_pos: [P] i32 padded positions
    n_images: traced i32 scalar
    """
    rows = p_pad // 128

    # Row-gather coordinates, fold transpose into the 3D repack.
    coordflat = coordinates.reshape(-1, 3)[real_atoms]                 # (A, 3)
    cf = coordflat[pair_first_p]                                       # (p_pad, 3)
    cs = coordflat[pair_second_p]                                      # (p_pad, 3)
    f_packed = jnp.concatenate([cf, cs], axis=1).astype(jnp.float32)   # (p_pad, 6)
    f_packed = f_packed.T.reshape(6, rows, 128)                        # (6, rows, 128)
    pk_packed = packed_off_p.astype(jnp.int32).reshape(1, rows, 128)   # (1, rows, 128)
    cell_flat = cell.reshape(-1).astype(jnp.float32)                   # (n_mol*9,)

    out = pl.pallas_call(
        _pair_kernel,
        grid=(num_tiles,),
        in_specs=[
            pl.BlockSpec(memory_space=pltpu.MemorySpace.SMEM),   # tile_mol
            pl.BlockSpec(memory_space=pltpu.MemorySpace.SMEM),   # cell table
            pl.BlockSpec((6, ROWS_TILE, 128), lambda t: (0, t, 0)),
            pl.BlockSpec((1, ROWS_TILE, 128), lambda t: (0, t, 0)),
        ],
        out_specs=pl.BlockSpec((4, ROWS_TILE, 128), lambda t: (0, t, 0)),
        out_shape=jax.ShapeDtypeStruct((4, rows, 128), jnp.float32),
        compiler_params=pltpu.CompilerParams(
            dimension_semantics=("parallel",)),
    )(tile_mol, cell_flat, f_packed, pk_packed)

    out_flat = out.reshape(4, p_pad)
    paircoord = out_flat[0:3, :].T[out_pos]                            # (P, 3)
    distflat2 = out_flat[3, :][out_pos]                                # (P,)

    # offset_index computed in the wrapper (tiny, avoids bitcast round-trip).
    n_off = 2 * n_images + 1
    o = offsets.astype(jnp.int32) + n_images
    offset_index = (o[:, 2] + n_off * (o[:, 1] + n_off * o[:, 0])).astype(jnp.int32)
    return distflat2, paircoord, offset_index


# ----------------------------------------------------------------------------
# Host-side glue reproducing _DispatchNeighbors.forward
# ----------------------------------------------------------------------------
class DispatchNeighborsJAX:
    def __init__(self, dist_hard_max):
        self.dist_hard_max = dist_hard_max
        self.set_combinator(1)

    def set_combinator(self, n_images):
        self.n_images = int(n_images)

    # TODO(synk): compute_one is abstract (NotImplemented) in the PyTorch base
    # class; here we provide a deterministic brute-force periodic pair finder
    # (images in [-1,1]^3) so the forward pass is runnable.
    def compute_one(self, r, c):
        r = np.asarray(r, dtype=np.float64)
        c = np.asarray(c, dtype=np.float64)
        pf_all, ps_all, off_all = [], [], []
        for oa in (-1, 0, 1):
            for ob in (-1, 0, 1):
                for oc in (-1, 0, 1):
                    off = np.array([oa, ob, oc], dtype=np.float64)
                    shift = off @ c
                    d = np.linalg.norm(r[:, None, :] - r[None, :, :] + shift, axis=-1)
                    mask = d < self.dist_hard_max
                    if oa == 0 and ob == 0 and oc == 0:
                        np.fill_diagonal(mask, False)
                    i, j = np.nonzero(mask)
                    pf_all.append(i)
                    ps_all.append(j)
                    off_all.append(np.broadcast_to(
                        np.array([oa, ob, oc], dtype=np.int32), (i.shape[0], 3)))
        pf = np.concatenate(pf_all)
        ps = np.concatenate(ps_all)
        offs = np.concatenate(off_all).astype(np.int32)
        return pf, ps, offs

    def forward(self, coordinates, nonblank, real_atoms, inv_real_atoms, cell,
                mol_index, n_molecules, n_atoms_max):
        coords_np = np.asarray(coordinates)
        nonblank_np = np.asarray(nonblank)
        cell_np = np.asarray(cell)
        inv_np = np.asarray(inv_real_atoms).reshape(n_molecules, n_atoms_max)

        # Per-molecule neighbor-list construction (dynamic shapes -> host glue).
        nlist = []
        for m in range(n_molecules):
            nb = nonblank_np[m]
            r = coords_np[m][nb]
            sia = inv_np[m][nb]
            pf, ps, of = self.compute_one(r, cell_np[m])
            nlist.append((sia[pf].astype(np.int32), sia[ps].astype(np.int32),
                          of.astype(np.int32)))

        pair_first = np.concatenate([x[0] for x in nlist]).astype(np.int32)
        pair_second = np.concatenate([x[1] for x in nlist]).astype(np.int32)
        offsets = np.concatenate([x[2] for x in nlist]).astype(np.int32)
        P = int(pair_first.shape[0])

        if P == 0:
            # No pairs: skip the kernel launch entirely.
            return (jnp.zeros((0,), jnp.float32), jnp.zeros((0,), jnp.int32),
                    jnp.zeros((0,), jnp.int32), jnp.zeros((0, 3), jnp.float32),
                    jnp.zeros((0, 3), jnp.int32), jnp.zeros((0,), jnp.int32))

        self.set_combinator(int(np.abs(offsets).max()))

        # --- Molecule-tile-aligned padded layout (one molecule per grid step) ---
        seg_counts = [int(x[0].shape[0]) for x in nlist]
        seg_tiles = [int(np.ceil(c / TILE_PAIRS)) if c > 0 else 0 for c in seg_counts]
        num_tiles = int(sum(seg_tiles))
        p_pad = num_tiles * TILE_PAIRS

        pair_first_p = np.zeros(p_pad, np.int32)
        pair_second_p = np.zeros(p_pad, np.int32)
        # padded entries decode to offsets (0,0,0): packed value 0x808080
        packed_off_p = np.full(p_pad, 128 + (128 << 8) + (128 << 16), np.int32)
        tile_mol = np.zeros(max(num_tiles, 1), np.int32)
        out_pos = np.zeros(P, np.int32)

        pad_cursor = 0
        tile_cursor = 0
        orig_cursor = 0
        for m, (pf_m, ps_m, of_m) in enumerate(nlist):
            cnt = int(pf_m.shape[0])
            if cnt == 0:
                continue
            nt = seg_tiles[m]
            pair_first_p[pad_cursor:pad_cursor + cnt] = pf_m
            pair_second_p[pad_cursor:pad_cursor + cnt] = ps_m
            packed_off_p[pad_cursor:pad_cursor + cnt] = (
                (of_m[:, 0].astype(np.int32) + 128)
                + ((of_m[:, 1].astype(np.int32) + 128) << 8)
                + ((of_m[:, 2].astype(np.int32) + 128) << 16)).astype(np.int32)
            tile_mol[tile_cursor:tile_cursor + nt] = m
            out_pos[orig_cursor:orig_cursor + cnt] = (
                pad_cursor + np.arange(cnt, dtype=np.int32))
            pad_cursor += nt * TILE_PAIRS
            tile_cursor += nt
            orig_cursor += cnt

        distflat2, paircoord, offset_index = _pair_math_device(
            jnp.asarray(coordinates, dtype=jnp.float32),
            jnp.asarray(real_atoms, dtype=jnp.int32),
            jnp.asarray(pair_first_p), jnp.asarray(pair_second_p),
            jnp.asarray(packed_off_p), jnp.asarray(tile_mol),
            jnp.asarray(cell, dtype=jnp.float32),
            jnp.asarray(offsets), jnp.asarray(out_pos),
            jnp.int32(self.n_images),
            p_pad=int(p_pad), num_tiles=int(num_tiles))

        return (distflat2, jnp.asarray(pair_first), jnp.asarray(pair_second),
                paircoord, jnp.asarray(offsets), offset_index)


# ----------------------------------------------------------------------------
if __name__ == "__main__":
    key = jax.random.PRNGKey(0)
    n_molecules, n_atoms_max = 2, 8
    dist_hard_max = 3.5

    coordinates = jax.random.uniform(
        key, (n_molecules, n_atoms_max, 3), dtype=jnp.float32) * 6.0
    cell = jnp.stack([jnp.eye(3, dtype=jnp.float32) * 6.0,
                      jnp.eye(3, dtype=jnp.float32) * 6.5])
    nonblank = jnp.array([[True] * 6 + [False] * 2,
                          [True] * 8])

    nonblank_flat = np.asarray(nonblank).reshape(-1)
    real_atoms = np.nonzero(nonblank_flat)[0].astype(np.int32)
    inv_real_atoms = np.zeros(n_molecules * n_atoms_max, dtype=np.int32)
    inv_real_atoms[real_atoms] = np.arange(real_atoms.shape[0], dtype=np.int32)
    mol_index = (real_atoms // n_atoms_max).astype(np.int32)

    mod = DispatchNeighborsJAX(dist_hard_max)
    out = mod.forward(coordinates, nonblank, real_atoms, inv_real_atoms,
                      cell, mol_index, n_molecules, n_atoms_max)
    out = jax.block_until_ready(out)
    distflat2, pair_first, pair_second, paircoord, offsets, offset_index = out

    # Numerical cross-check against a pure numpy reference of the hot path.
    coordflat_np = np.asarray(coordinates).reshape(-1, 3)[real_atoms]
    pf_np = np.asarray(pair_first)
    ps_np = np.asarray(pair_second)
    off_np = np.asarray(offsets)
    pair_cell_np = np.asarray(cell)[mol_index[pf_np]]
    pair_off_ref = np.einsum('pi,pij->pj', off_np.astype(np.float32), pair_cell_np)
    pc_ref = coordflat_np[pf_np] - coordflat_np[ps_np] + pair_off_ref
    dist_ref = np.linalg.norm(pc_ref, axis=1)
    n_off = 2 * mod.n_images + 1
    o = off_np + mod.n_images
    oidx_ref = o[:, 2] + n_off * (o[:, 1] + n_off * o[:, 0])

    assert pf_np.shape[0] > 0, "no pairs found"
    np.testing.assert_allclose(np.asarray(paircoord), pc_ref, rtol=1e-5, atol=1e-5)
    np.testing.assert_allclose(np.asarray(distflat2), dist_ref, rtol=1e-5, atol=1e-5)
    np.testing.assert_array_equal(np.asarray(offset_index), oidx_ref)

    print("KERNEL_OK")
</pallas_src>

<mosaic_0001>
module attributes {stable_mosaic.version = 11 : i64} {
  func.func @_pair_kernel(%arg0: i32, %arg1: memref<2xi32, #tpu.memory_space<smem>>, %arg2: memref<18xf32, #tpu.memory_space<smem>>, %arg3: memref<6x64x128xf32, #tpu.memory_space<vmem>>, %arg4: memref<1x64x128xi32, #tpu.memory_space<vmem>>, %arg5: memref<4x64x128xf32, #tpu.memory_space<vmem>>) attributes {dimension_semantics = [#tpu.dimension_semantics<parallel>], iteration_bounds = array<i64: 2>, scalar_prefetch = 0 : i64, scratch_operands = 0 : i64, tpu.core_type = #tpu.core_type<tc>, window_params = [{transform_indices = @transform_0, window_bounds = array<i64: 2>}, {transform_indices = @transform_1, window_bounds = array<i64: 18>}, {transform_indices = @transform_2, window_bounds = array<i64: 6, 64, 128>}, {transform_indices = @transform_3, window_bounds = array<i64: 1, 64, 128>}, {transform_indices = @transform_4, window_bounds = array<i64: 4, 64, 128>}]} {
    %0 = arith.index_cast %arg0 : i32 to index
    %1 = memref.load %arg1[%0] : memref<2xi32, #tpu.memory_space<smem>>
    %c9_i32 = arith.constant 9 : i32
    %2 = arith.muli %1, %c9_i32 : i32
    %c0 = arith.constant 0 : index
    %c0_0 = arith.constant 0 : index
    %c0_1 = arith.constant 0 : index
    %3 = vector.load %arg4[%c0, %c0_0, %c0_1] : memref<1x64x128xi32, #tpu.memory_space<vmem>>, vector<1x64x128xi32>
    %4 = vector.shape_cast %3 : vector<1x64x128xi32> to vector<64x128xi32>
    %c0_i32 = arith.constant 0 : i32
    %5 = vector.broadcast %c0_i32 : i32 to vector<64x128xi32>
    %6 = arith.shrsi %4, %5 : vector<64x128xi32>
    %c255_i32 = arith.constant 255 : i32
    %7 = vector.broadcast %c255_i32 : i32 to vector<64x128xi32>
    %8 = arith.andi %6, %7 : vector<64x128xi32>
    %c128_i32 = arith.constant 128 : i32
    %9 = vector.broadcast %c128_i32 : i32 to vector<64x128xi32>
    %10 = arith.subi %8, %9 : vector<64x128xi32>
    %11 = arith.sitofp %10 : vector<64x128xi32> to vector<64x128xf32>
    %c8_i32 = arith.constant 8 : i32
    %12 = vector.broadcast %c8_i32 : i32 to vector<64x128xi32>
    %13 = arith.shrsi %4, %12 : vector<64x128xi32>
    %c255_i32_2 = arith.constant 255 : i32
    %14 = vector.broadcast %c255_i32_2 : i32 to vector<64x128xi32>
    %15 = arith.andi %13, %14 : vector<64x128xi32>
    %c128_i32_3 = arith.constant 128 : i32
    %16 = vector.broadcast %c128_i32_3 : i32 to vector<64x128xi32>
    %17 = arith.subi %15, %16 : vector<64x128xi32>
    %18 = arith.sitofp %17 : vector<64x128xi32> to vector<64x128xf32>
    %c16_i32 = arith.constant 16 : i32
    %19 = vector.broadcast %c16_i32 : i32 to vector<64x128xi32>
    %20 = arith.shrsi %4, %19 : vector<64x128xi32>
    %c255_i32_4 = arith.constant 255 : i32
    %21 = vector.broadcast %c255_i32_4 : i32 to vector<64x128xi32>
    %22 = arith.andi %20, %21 : vector<64x128xi32>
    %c128_i32_5 = arith.constant 128 : i32
    %23 = vector.broadcast %c128_i32_5 : i32 to vector<64x128xi32>
    %24 = arith.subi %22, %23 : vector<64x128xi32>
    %25 = arith.sitofp %24 : vector<64x128xi32> to vector<64x128xf32>
    %c0_i32_6 = arith.constant 0 : i32
    %26 = arith.addi %2, %c0_i32_6 : i32
    %27 = arith.index_cast %26 : i32 to index
    %28 = memref.load %arg2[%27] : memref<18xf32, #tpu.memory_space<smem>>
    %29 = vector.broadcast %28 : f32 to vector<64x128xf32>
    %30 = arith.mulf %11, %29 : vector<64x128xf32>
    %c3_i32 = arith.constant 3 : i32
    %31 = arith.addi %2, %c3_i32 : i32
    %c0_i32_7 = arith.constant 0 : i32
    %32 = arith.addi %31, %c0_i32_7 : i32
    %33 = arith.index_cast %32 : i32 to index
    %34 = memref.load %arg2[%33] : memref<18xf32, #tpu.memory_space<smem>>
    %35 = vector.broadcast %34 : f32 to vector<64x128xf32>
    %36 = arith.mulf %18, %35 : vector<64x128xf32>
    %37 = arith.addf %30, %36 : vector<64x128xf32>
    %c6_i32 = arith.constant 6 : i32
    %38 = arith.addi %2, %c6_i32 : i32
    %c0_i32_8 = arith.constant 0 : i32
    %39 = arith.addi %38, %c0_i32_8 : i32
    %40 = arith.index_cast %39 : i32 to index
    %41 = memref.load %arg2[%40] : memref<18xf32, #tpu.memory_space<smem>>
    %42 = vector.broadcast %41 : f32 to vector<64x128xf32>
    %43 = arith.mulf %25, %42 : vector<64x128xf32>
    %44 = arith.addf %37, %43 : vector<64x128xf32>
    %c0_9 = arith.constant 0 : index
    %c0_10 = arith.constant 0 : index
    %c0_11 = arith.constant 0 : index
    %45 = vector.load %arg3[%c0_9, %c0_10, %c0_11] : memref<6x64x128xf32, #tpu.memory_space<vmem>>, vector<1x64x128xf32>
    %46 = vector.shape_cast %45 : vector<1x64x128xf32> to vector<64x128xf32>
    %c3 = arith.constant 3 : index
    %c0_12 = arith.constant 0 : index
    %c0_13 = arith.constant 0 : index
    %47 = vector.load %arg3[%c3, %c0_12, %c0_13] : memref<6x64x128xf32, #tpu.memory_space<vmem>>, vector<1x64x128xf32>
    %48 = vector.shape_cast %47 : vector<1x64x128xf32> to vector<64x128xf32>
    %49 = arith.subf %46, %48 : vector<64x128xf32>
    %50 = arith.addf %49, %44 : vector<64x128xf32>
    %c0_14 = arith.constant 0 : index
    %c0_15 = arith.constant 0 : index
    %c0_16 = arith.constant 0 : index
    %51 = vector.load %arg5[%c0_14, %c0_15, %c0_16] : memref<4x64x128xf32, #tpu.memory_space<vmem>>, vector<1x64x128xf32>
    %52 = vector.shape_cast %51 : vector<1x64x128xf32> to vector<64x128xf32>
    %53 = vector.shape_cast %50 : vector<64x128xf32> to vector<1x64x128xf32>
    tpu.vector_store %arg5[%c0_14, %c0_15, %c0_16], %53 {strides = array<i32>} : memref<4x64x128xf32, #tpu.memory_space<vmem>>, vector<1x64x128xf32>,
    %54 = arith.mulf %50, %50 : vector<64x128xf32>
    %c1_i32 = arith.constant 1 : i32
    %55 = arith.addi %2, %c1_i32 : i32
    %56 = arith.index_cast %55 : i32 to index
    %57 = memref.load %arg2[%56] : memref<18xf32, #tpu.memory_space<smem>>
    %58 = vector.broadcast %57 : f32 to vector<64x128xf32>
    %59 = arith.mulf %11, %58 : vector<64x128xf32>
    %c3_i32_17 = arith.constant 3 : i32
    %60 = arith.addi %2, %c3_i32_17 : i32
    %c1_i32_18 = arith.constant 1 : i32
    %61 = arith.addi %60, %c1_i32_18 : i32
    %62 = arith.index_cast %61 : i32 to index
    %63 = memref.load %arg2[%62] : memref<18xf32, #tpu.memory_space<smem>>
    %64 = vector.broadcast %63 : f32 to vector<64x128xf32>
    %65 = arith.mulf %18, %64 : vector<64x128xf32>
    %66 = arith.addf %59, %65 : vector<64x128xf32>
    %c6_i32_19 = arith.constant 6 : i32
    %67 = arith.addi %2, %c6_i32_19 : i32
    %c1_i32_20 = arith.constant 1 : i32
    %68 = arith.addi %67, %c1_i32_20 : i32
    %69 = arith.index_cast %68 : i32 to index
    %70 = memref.load %arg2[%69] : memref<18xf32, #tpu.memory_space<smem>>
    %71 = vector.broadcast %70 : f32 to vector<64x128xf32>
    %72 = arith.mulf %25, %71 : vector<64x128xf32>
    %73 = arith.addf %66, %72 : vector<64x128xf32>
    %c1 = arith.constant 1 : index
    %c0_21 = arith.constant 0 : index
    %c0_22 = arith.constant 0 : index
    %74 = vector.load %arg3[%c1, %c0_21, %c0_22] : memref<6x64x128xf32, #tpu.memory_space<vmem>>, vector<1x64x128xf32>
    %75 = vector.shape_cast %74 : vector<1x64x128xf32> to vector<64x128xf32>
    %c4 = arith.constant 4 : index
    %c0_23 = arith.constant 0 : index
    %c0_24 = arith.constant 0 : index
    %76 = vector.load %arg3[%c4, %c0_23, %c0_24] : memref<6x64x128xf32, #tpu.memory_space<vmem>>, vector<1x64x128xf32>
    %77 = vector.shape_cast %76 : vector<1x64x128xf32> to vector<64x128xf32>
    %78 = arith.subf %75, %77 : vector<64x128xf32>
    %79 = arith.addf %78, %73 : vector<64x128xf32>
    %c1_25 = arith.constant 1 : index
    %c0_26 = arith.constant 0 : index
    %c0_27 = arith.constant 0 : index
    %80 = vector.load %arg5[%c1_25, %c0_26, %c0_27] : memref<4x64x128xf32, #tpu.memory_space<vmem>>, vector<1x64x128xf32>
    %81 = vector.shape_cast %80 : vector<1x64x128xf32> to vector<64x128xf32>
    %82 = vector.shape_cast %79 : vector<64x128xf32> to vector<1x64x128xf32>
    tpu.vector_store %arg5[%c1_25, %c0_26, %c0_27], %82 {strides = array<i32>} : memref<4x64x128xf32, #tpu.memory_space<vmem>>, vector<1x64x128xf32>,
    %83 = arith.mulf %79, %79 : vector<64x128xf32>
    %84 = arith.addf %54, %83 : vector<64x128xf32>
    %c2_i32 = arith.constant 2 : i32
    %85 = arith.addi %2, %c2_i32 : i32
    %86 = arith.index_cast %85 : i32 to index
    %87 = memref.load %arg2[%86] : memref<18xf32, #tpu.memory_space<smem>>
    %88 = vector.broadcast %87 : f32 to vector<64x128xf32>
    %89 = arith.mulf %11, %88 : vector<64x128xf32>
    %c3_i32_28 = arith.constant 3 : i32
    %90 = arith.addi %2, %c3_i32_28 : i32
    %c2_i32_29 = arith.constant 2 : i32
    %91 = arith.addi %90, %c2_i32_29 : i32
    %92 = arith.index_cast %91 : i32 to index
    %93 = memref.load %arg2[%92] : memref<18xf32, #tpu.memory_space<smem>>
    %94 = vector.broadcast %93 : f32 to vector<64x128xf32>
    %95 = arith.mulf %18, %94 : vector<64x128xf32>
    %96 = arith.addf %89, %95 : vector<64x128xf32>
    %c6_i32_30 = arith.constant 6 : i32
    %97 = arith.addi %2, %c6_i32_30 : i32
    %c2_i32_31 = arith.constant 2 : i32
    %98 = arith.addi %97, %c2_i32_31 : i32
    %99 = arith.index_cast %98 : i32 to index
    %100 = memref.load %arg2[%99] : memref<18xf32, #tpu.memory_space<smem>>
    %101 = vector.broadcast %100 : f32 to vector<64x128xf32>
    %102 = arith.mulf %25, %101 : vector<64x128xf32>
    %103 = arith.addf %96, %102 : vector<64x128xf32>
    %c2 = arith.constant 2 : index
    %c0_32 = arith.constant 0 : index
    %c0_33 = arith.constant 0 : index
    %104 = vector.load %arg3[%c2, %c0_32, %c0_33] : memref<6x64x128xf32, #tpu.memory_space<vmem>>, vector<1x64x128xf32>
    %105 = vector.shape_cast %104 : vector<1x64x128xf32> to vector<64x128xf32>
    %c5 = arith.constant 5 : index
    %c0_34 = arith.constant 0 : index
    %c0_35 = arith.constant 0 : index
    %106 = vector.load %arg3[%c5, %c0_34, %c0_35] : memref<6x64x128xf32, #tpu.memory_space<vmem>>, vector<1x64x128xf32>
    %107 = vector.shape_cast %106 : vector<1x64x128xf32> to vector<64x128xf32>
    %108 = arith.subf %105, %107 : vector<64x128xf32>
    %109 = arith.addf %108, %103 : vector<64x128xf32>
    %c2_36 = arith.constant 2 : index
    %c0_37 = arith.constant 0 : index
    %c0_38 = arith.constant 0 : index
    %110 = vector.load %arg5[%c2_36, %c0_37, %c0_38] : memref<4x64x128xf32, #tpu.memory_space<vmem>>, vector<1x64x128xf32>
    %111 = vector.shape_cast %110 : vector<1x64x128xf32> to vector<64x128xf32>
    %112 = vector.shape_cast %109 : vector<64x128xf32> to vector<1x64x128xf32>
    tpu.vector_store %arg5[%c2_36, %c0_37, %c0_38], %112 {strides = array<i32>} : memref<4x64x128xf32, #tpu.memory_space<vmem>>, vector<1x64x128xf32>,
    %113 = arith.mulf %109, %109 : vector<64x128xf32>
    %114 = arith.addf %84, %113 : vector<64x128xf32>
    %115 = math.sqrt %114 : vector<64x128xf32>
    %c3_39 = arith.constant 3 : index
    %c0_40 = arith.constant 0 : index
    %c0_41 = arith.constant 0 : index
    %116 = vector.load %arg5[%c3_39, %c0_40, %c0_41] : memref<4x64x128xf32, #tpu.memory_space<vmem>>, vector<1x64x128xf32>
    %117 = vector.shape_cast %116 : vector<1x64x128xf32> to vector<64x128xf32>
    %118 = vector.shape_cast %115 : vector<64x128xf32> to vector<1x64x128xf32>
    tpu.vector_store %arg5[%c3_39, %c0_40, %c0_41], %118 {strides = array<i32>} : memref<4x64x128xf32, #tpu.memory_space<vmem>>, vector<1x64x128xf32>,
    return
  }
  func.func @transform_0(%arg0: i32) -> i32 {
    %c0_i32 = arith.constant 0 : i32
    %c0_i32_0 = arith.constant 0 : i32
    return %c0_i32 : i32
  }
  func.func @transform_1(%arg0: i32) -> i32 {
    %c0_i32 = arith.constant 0 : i32
    %c0_i32_0 = arith.constant 0 : i32
    return %c0_i32 : i32
  }
  func.func @transform_2(%arg0: i32) -> (i32, i32, i32) {
    %c0_i32 = arith.constant 0 : i32
    %c0_i32_0 = arith.constant 0 : i32
    %c0_i32_1 = arith.constant 0 : i32
    return %c0_i32, %arg0, %c0_i32_0 : i32, i32, i32
  }
  func.func @transform_3(%arg0: i32) -> (i32, i32, i32) {
    %c0_i32 = arith.constant 0 : i32
    %c0_i32_0 = arith.constant 0 : i32
    %c0_i32_1 = arith.constant 0 : i32
    return %c0_i32, %arg0, %c0_i32_0 : i32, i32, i32
  }
  func.func @transform_4(%arg0: i32) -> (i32, i32, i32) {
    %c0_i32 = arith.constant 0 : i32
    %c0_i32_0 = arith.constant 0 : i32
    %c0_i32_1 = arith.constant 0 : i32
    return %c0_i32, %arg0, %c0_i32_0 : i32, i32, i32
  }
}

</mosaic_0001>

<llo_original>
// kernel: _pair_math_device.1
$region0: #{_pair_math_device.1}
  #allocation0 [shape = 'u32[]', space=smem, size = 0x4, offset = 0x4, fixed_abs, tag = 'smem constant byte address 0x4 - core index']
  #allocation1 [shape = 'u32[144,128]{1,0:T(1,128)}', space=vmem, size = 0x12000, scoped, tag = 'internal scratch']
  %s0 = inlined_call_operand.vmem [shape: s32[2], index: 0, kind: input, shape index: {}]
  %s1 = inlined_call_operand.vmem [shape: f32[18], index: 1, kind: input, shape index: {}]
  %s2 = inlined_call_operand.vmem [shape: f32[6,128,128], index: 2, kind: input, shape index: {}]
  %s3 = inlined_call_operand.vmem [shape: s32[1,128,128], index: 3, kind: input, shape index: {}]
  %s4 = inlined_call_operand.vmem [shape: f32[4,128,128], index: 4, kind: output, shape index: {}]
  %s5 = sld [smem:[#allocation0]]
  $region129: #{_pair_math_device.1} parent=0
    _
  %s7 = ssub.s32 1, %s5
  %s8 = scalar_select 0, %s7, %s5
  $region1: #{_pair_math_device.1} parent=0
    #allocation2 [shape = 'u8[512]{0}', space=smem, size = 0x200, scoped, tag = 'input window, operand 0, single buffered']
    #allocation3 [shape = 's32[2]{0}', space=sflag, size = 0x8, scoped, tag = 'scoped memory for _pair_math_device.1']
    #allocation4 [shape = 'u8[512]{0}', space=smem, size = 0x200, scoped, tag = 'input window, operand 1, single buffered']
    #allocation5 [shape = 's32[1]{0}', space=sflag, size = 0x4, scoped, tag = 'scoped memory for _pair_math_device.1']
    #allocation6 [shape = 'u8[393216]{0}', space=vmem, size = 0x60000, scoped, tag = 'input window, operand 2']
    #allocation7 [shape = 'u8[262144]{0}', space=vmem, size = 0x40000, scoped, tag = 'output window, operand 0']
    %9 = vsyncpa [#allocation3], 0
    %10 = vsyncpa [#allocation5], 0
    loop: start=0, step=1, limit=4
    $region2: #{_pair_math_device.1} parent=1 // loop_pre_header
      _
    $region3: #{_pair_math_device.1} parent=1 // loop_header
      %s12 = sphi 0, %s16
      %p13 = scmp.ge.s32.totalorder %s12, 4
      %s20 = sphi 0, %s20
      %s22 = sphi 0, %s20
      %s23 = sphi 0, %s22
      %s37 = sphi 0, %s23
      %s41 = sphi 0, %s41
      %s43 = sphi 0, %s41
      %s44 = sphi 0, %s43
      %s58 = sphi 0, %s44
      %s64 = sphi 0, %s66
      %s67 = sphi 0, %s64
      %s68 = sphi 0, %s67
      %s84 = sphi 0, %s68
      %s90 = sphi 0, %s92
      %s93 = sphi 0, %s90
      %s94 = sphi 0, %s93
      %s110 = sphi 0, %s94
      %s116 = sphi 0, %s118
      %s119 = sphi 0, %s116
      %s120 = sphi 0, %s119
      %s136 = sphi 0, %s120
    $region4: #{_pair_math_device.1} parent=1 // loop_header_branch
      %15 = sbr.rel (%p13) target = $region8
    $region5: #{_pair_math_device.1} parent=1 // loop_body
      %s17 = ssub.s32 %s12, 1
      %s18 = ssub.s32 %s12, 2
      %s19 = sadd.s32 %s12, 1
      %s21 = sadd.s32 %s20, 1
      %p24 = scmp.eq.s32.totalorder %s12, 1
      %p25 = scmp.ne.s32.totalorder %s20, %s22
      %p26 = scmp.eq.s32.totalorder %s12, 0
      %p27 = por %p25, %p26
      %p28 = scmp.ne.s32.totalorder %s20, %s22
      %p29 = scmp.eq.s32.totalorder %s17, 1
      %p30 = por %p28, %p29
      %p31 = scmp.ne.s32.totalorder %s22, %s23
      %p32 = scmp.eq.s32.totalorder %s17, 0
      %p33 = por %p31, %p32
      %p34 = scmp.ne.s32.totalorder %s22, %s23
      %p35 = scmp.eq.s32.totalorder %s18, 1
      %p36 = por %p34, %p35
      %p38 = scmp.ne.s32.totalorder %s23, %s37
      %p39 = scmp.eq.s32.totalorder %s18, 0
      %p40 = por %p38, %p39
      %s42 = sadd.s32 %s41, 1
      %p45 = scmp.eq.s32.totalorder %s12, 1
      %p46 = scmp.ne.s32.totalorder %s41, %s43
      %p47 = scmp.eq.s32.totalorder %s12, 0
      %p48 = por %p46, %p47
      %p49 = scmp.ne.s32.totalorder %s41, %s43
      %p50 = scmp.eq.s32.totalorder %s17, 1
      %p51 = por %p49, %p50
      %p52 = scmp.ne.s32.totalorder %s43, %s44
      %p53 = scmp.eq.s32.totalorder %s17, 0
      %p54 = por %p52, %p53
      %p55 = scmp.ne.s32.totalorder %s43, %s44
      %p56 = scmp.eq.s32.totalorder %s18, 1
      %p57 = por %p55, %p56
      %p59 = scmp.ne.s32.totalorder %s44, %s58
      %p60 = scmp.eq.s32.totalorder %s18, 0
      %p61 = por %p59, %p60
      %s62 = ssub.s32 %s12, %s19
      %p63 = scmp.eq.s32.totalorder %s62, 0
      %s65 = sadd.s32 %s64, 1
      %s66 = scalar_select %p63, %s64, %s65
      %p69 = pneg %p63
      %p70 = scmp.eq.s32.totalorder %s12, 1
      %p71 = por %p69, %p70
      %p72 = scmp.ne.s32.totalorder %s64, %s67
      %p73 = scmp.eq.s32.totalorder %s12, 0
      %p74 = por %p72, %p73
      %p75 = scmp.ne.s32.totalorder %s64, %s67
      %p76 = scmp.eq.s32.totalorder %s17, 1
      %p77 = por %p75, %p76
      %p78 = scmp.ne.s32.totalorder %s67, %s68
      %p79 = scmp.eq.s32.totalorder %s17, 0
      %p80 = por %p78, %p79
      %p81 = scmp.ne.s32.totalorder %s67, %s68
      %p82 = scmp.eq.s32.totalorder %s18, 1
      %p83 = por %p81, %p82
      %p85 = scmp.ne.s32.totalorder %s68, %s84
      %p86 = scmp.eq.s32.totalorder %s18, 0
      %p87 = por %p85, %p86
      %s88 = ssub.s32 %s12, %s19
      %p89 = scmp.eq.s32.totalorder %s88, 0
      %s91 = sadd.s32 %s90, 1
      %s92 = scalar_select %p89, %s90, %s91
      %p95 = pneg %p89
      %p96 = scmp.eq.s32.totalorder %s12, 1
      %p97 = por %p95, %p96
      %p98 = scmp.ne.s32.totalorder %s90, %s93
      %p99 = scmp.eq.s32.totalorder %s12, 0
      %p100 = por %p98, %p99
      %p101 = scmp.ne.s32.totalorder %s90, %s93
      %p102 = scmp.eq.s32.totalorder %s17, 1
      %p103 = por %p101, %p102
      %p104 = scmp.ne.s32.totalorder %s93, %s94
      %p105 = scmp.eq.s32.totalorder %s17, 0
      %p106 = por %p104, %p105
      %p107 = scmp.ne.s32.totalorder %s93, %s94
      %p108 = scmp.eq.s32.totalorder %s18, 1
      %p109 = por %p107, %p108
      %p111 = scmp.ne.s32.totalorder %s94, %s110
      %p112 = scmp.eq.s32.totalorder %s18, 0
      %p113 = por %p111, %p112
      %s114 = ssub.s32 %s12, %s19
      %p115 = scmp.eq.s32.totalorder %s114, 0
      %s117 = sadd.s32 %s116, 1
      %s118 = scalar_select %p115, %s116, %s117
      %p121 = pneg %p115
      %p122 = scmp.eq.s32.totalorder %s12, 1
      %p123 = por %p121, %p122
      %p124 = scmp.ne.s32.totalorder %s116, %s119
      %p125 = scmp.eq.s32.totalorder %s12, 0
      %p126 = por %p124, %p125
      %p127 = scmp.ne.s32.totalorder %s116, %s119
      %p128 = scmp.eq.s32.totalorder %s17, 1
      %p129 = por %p127, %p128
      %p130 = scmp.ne.s32.totalorder %s119, %s120
      %p131 = scmp.eq.s32.totalorder %s17, 0
      %p132 = por %p130, %p131
      %p133 = scmp.ne.s32.totalorder %s119, %s120
      %p134 = scmp.eq.s32.totalorder %s18, 1
      %p135 = por %p133, %p134
      %p137 = scmp.ne.s32.totalorder %s120, %s136
      %p138 = scmp.eq.s32.totalorder %s18, 0
      %p139 = por %p137, %p138
      %p140 = scmp.le.s32.totalorder 1, %s12
      %p141 = scmp.lt.s32.totalorder %s12, 3
      %p142 = pnand %p140, %p141
      %p143 = pneg %p142
      // Predicated region
      $region9: #{_pair_math_device.1} parent=5 // pred_check
        _
      $region10: #{_pair_math_device.1} parent=5 // pred_check_branch
        %145 = sbr.rel (%p142) target = $region12
      $region11: #{_pair_math_device.1} parent=5 // pred_region
        %s146 = ssub.s32 %s12, 1
        // Predicated region
        $region13: #{_pair_math_device.1} parent=11 // pred_check
          %p147 = pneg %p33
        $region14: #{_pair_math_device.1} parent=11 // pred_check_branch
          %149 = sbr.rel (%p147) target = $region16
        $region15: #{_pair_math_device.1} parent=11 // pred_region
          %s151 = ssub.s32 16, 16
          %152 = vsyncadd [#allocation3], %s151
          %s154 = sshll.u32 %s0, 4
          %s155 = int_to_ptr.vmem [resolvable:$true] %s154
          %157 = dma.vmem_to_smem %s155, 16, [#allocation2], [#allocation3]
        $region16: #{_pair_math_device.1} parent=11 // pred_fallthru
          _
        // Predicated region
        $region17: #{_pair_math_device.1} parent=11 // pred_check
          %p158 = pneg %p54
        $region18: #{_pair_math_device.1} parent=11 // pred_check_branch
          %160 = sbr.rel (%p158) target = $region20
        $region19: #{_pair_math_device.1} parent=11 // pred_region
          %s162 = ssub.s32 16, 16
          %163 = vsyncadd [#allocation5], %s162
          %s165 = sshll.u32 %s1, 4
          %s166 = int_to_ptr.vmem [resolvable:$true] %s165
          %168 = dma.vmem_to_smem %s166, 16, [#allocation4], [#allocation5]
        $region20: #{_pair_math_device.1} parent=11 // pred_fallthru
          _
      $region12: #{_pair_math_device.1} parent=5 // pred_fallthru
        _
      %p169 = scmp.lt.s32.totalorder %s12, 2
      // Predicated region
      $region21: #{_pair_math_device.1} parent=5 // pred_check
        %p170 = pneg %p169
      $region22: #{_pair_math_device.1} parent=5 // pred_check_branch
        %172 = sbr.rel (%p170) target = $region24
      $region23: #{_pair_math_device.1} parent=5 // pred_region
        // Predicated region
        $region25: #{_pair_math_device.1} parent=23 // pred_check
          %p173 = pneg %p74
        $region26: #{_pair_math_device.1} parent=23 // pred_check_branch
          %175 = sbr.rel (%p173) target = $region28
        $region27: #{_pair_math_device.1} parent=23 // pred_region
          %s176 = sand.u32 %s64, 1
          %s177 = sand.u32 %s64, 1
          %s178 = smul.addr %s177, 384
          %s179 = scalar_lea.vmem [#allocation6], %s178
          %s180 = smul.u32 8, %s12
          %s181 = smul.addr %s180, 8
          %s182 = scalar_lea.vmem %s2, %s181
          // Predicated region
          $region29: #{_pair_math_device.1} parent=27 // pred_check
            _
          $region30: #{_pair_math_device.1} parent=27 // pred_check_branch
            %184 = sbr.rel (0) target = $region32
          $region31: #{_pair_math_device.1} parent=27 // pred_region
            // Predicated region
            $region33: #{_pair_math_device.1} parent=31 // pred_check
              _
            $region34: #{_pair_math_device.1} parent=31 // pred_check_branch
              %186 = sbr.rel (0) target = $region36
            $region35: #{_pair_math_device.1} parent=31 // pred_region
              // Predicated region
              $region48: #{_pair_math_device.1} parent=35 // pred_check
                _
              $region49: #{_pair_math_device.1} parent=35 // pred_check_branch
                %295 = sbr.rel (0) target = $region51
              $region50: #{_pair_math_device.1} parent=35 // pred_region
                loop: start=0, step=1, limit=1
                $region52: #{_pair_math_device.1} parent=50 // loop_pre_header
                  _
                $region53: #{_pair_math_device.1} parent=50 // loop_header
                  %s297 = sphi 0, %s301
                  %p298 = scmp.ge.s32.totalorder %s297, 1
                  %s302 = sphi %s182, %s182
                  %s303 = sphi %s179, %s179
                $region54: #{_pair_math_device.1} parent=50 // loop_header_branch
                  %300 = sbr.rel (%p298) target = $region58
                $region55: #{_pair_math_device.1} parent=50 // loop_body
                  %v304 = vld [vmem:[%s302] sm:$0xff]
                  %305 = vst [vmem:[%s303] sm:$0xff] %v304
                  %v306 = vld [vmem:[%s302 + $0x8] sm:$0xff]
                  %307 = vst [vmem:[%s303 + $0x8] sm:$0xff] %v306
                  %v308 = vld [vmem:[%s302 + $0x10] sm:$0xff]
                  %309 = vst [vmem:[%s303 + $0x10] sm:$0xff] %v308
                  %v310 = vld [vmem:[%s302 + $0x18] sm:$0xff]
                  %311 = vst [vmem:[%s303 + $0x18] sm:$0xff] %v310
                  %v312 = vld [vmem:[%s302 + $0x20] sm:$0xff]
                  %313 = vst [vmem:[%s303 + $0x20] sm:$0xff] %v312
                  %v314 = vld [vmem:[%s302 + $0x28] sm:$0xff]
                  %315 = vst [vmem:[%s303 + $0x28] sm:$0xff] %v314
                  %v316 = vld [vmem:[%s302 + $0x30] sm:$0xff]
                  %317 = vst [vmem:[%s303 + $0x30] sm:$0xff] %v316
                  %v318 = vld [vmem:[%s302 + $0x38] sm:$0xff]
                  %319 = vst [vmem:[%s303 + $0x38] sm:$0xff] %v318
                  %v320 = vld [vmem:[%s302 + $0x80] sm:$0xff]
                  %321 = vst [vmem:[%s303 + $0x40] sm:$0xff] %v320
                  %v322 = vld [vmem:[%s302 + $0x88] sm:$0xff]
                  %323 = vst [vmem:[%s303 + $0x48] sm:$0xff] %v322
                  %v324 = vld [vmem:[%s302 + $0x90] sm:$0xff]
                  %325 = vst [vmem:[%s303 + $0x50] sm:$0xff] %v324
                  %v326 = vld [vmem:[%s302 + $0x98] sm:$0xff]
                  %327 = vst [vmem:[%s303 + $0x58] sm:$0xff] %v326
                  %v328 = vld [vmem:[%s302 + $0xa0] sm:$0xff]
                  %329 = vst [vmem:[%s303 + $0x60] sm:$0xff] %v328
                  %v330 = vld [vmem:[%s302 + $0xa8] sm:$0xff]
                  %331 = vst [vmem:[%s303 + $0x68] sm:$0xff] %v330
                  %v332 = vld [vmem:[%s302 + $0xb0] sm:$0xff]
                  %333 = vst [vmem:[%s303 + $0x70] sm:$0xff] %v332
                  %v334 = vld [vmem:[%s302 + $0xb8] sm:$0xff]
                  %335 = vst [vmem:[%s303 + $0x78] sm:$0xff] %v334
                  %v336 = vld [vmem:[%s302 + $0x100] sm:$0xff]
                  %337 = vst [vmem:[%s303 + $0x80] sm:$0xff] %v336
                  %v338 = vld [vmem:[%s302 + $0x108] sm:$0xff]
                  %339 = vst [vmem:[%s303 + $0x88] sm:$0xff] %v338
                  %v340 = vld [vmem:[%s302 + $0x110] sm:$0xff]
                  %341 = vst [vmem:[%s303 + $0x90] sm:$0xff] %v340
                  %v342 = vld [vmem:[%s302 + $0x118] sm:$0xff]
                  %343 = vst [vmem:[%s303 + $0x98] sm:$0xff] %v342
                  %v344 = vld [vmem:[%s302 + $0x120] sm:$0xff]
                  %345 = vst [vmem:[%s303 + $0xa0] sm:$0xff] %v344
                  %v346 = vld [vmem:[%s302 + $0x128] sm:$0xff]
                  %347 = vst [vmem:[%s303 + $0xa8] sm:$0xff] %v346
                  %v348 = vld [vmem:[%s302 + $0x130] sm:$0xff]
                  %349 = vst [vmem:[%s303 + $0xb0] sm:$0xff] %v348
                  %v350 = vld [vmem:[%s302 + $0x138] sm:$0xff]
                  %351 = vst [vmem:[%s303 + $0xb8] sm:$0xff] %v350
                  %v352 = vld [vmem:[%s302 + $0x180] sm:$0xff]
                  %353 = vst [vmem:[%s303 + $0xc0] sm:$0xff] %v352
                  %v354 = vld [vmem:[%s302 + $0x188] sm:$0xff]
                  %355 = vst [vmem:[%s303 + $0xc8] sm:$0xff] %v354
                  %v356 = vld [vmem:[%s302 + $0x190] sm:$0xff]
                  %357 = vst [vmem:[%s303 + $0xd0] sm:$0xff] %v356
                  %v358 = vld [vmem:[%s302 + $0x198] sm:$0xff]
                  %359 = vst [vmem:[%s303 + $0xd8] sm:$0xff] %v358
                  %v360 = vld [vmem:[%s302 + $0x1a0] sm:$0xff]
                  %361 = vst [vmem:[%s303 + $0xe0] sm:$0xff] %v360
                  %v362 = vld [vmem:[%s302 + $0x1a8] sm:$0xff]
                  %363 = vst [vmem:[%s303 + $0xe8] sm:$0xff] %v362
                  %v364 = vld [vmem:[%s302 + $0x1b0] sm:$0xff]
                  %365 = vst [vmem:[%s303 + $0xf0] sm:$0xff] %v364
                  %v366 = vld [vmem:[%s302 + $0x1b8] sm:$0xff]
                  %367 = vst [vmem:[%s303 + $0xf8] sm:$0xff] %v366
                  %v368 = vld [vmem:[%s302 + $0x200] sm:$0xff]
                  %369 = vst [vmem:[%s303 + $0x100] sm:$0xff] %v368
                  %v370 = vld [vmem:[%s302 + $0x208] sm:$0xff]
                  %371 = vst [vmem:[%s303 + $0x108] sm:$0xff] %v370
                  %v372 = vld [vmem:[%s302 + $0x210] sm:$0xff]
                  %373 = vst [vmem:[%s303 + $0x110] sm:$0xff] %v372
                  %v374 = vld [vmem:[%s302 + $0x218] sm:$0xff]
                  %375 = vst [vmem:[%s303 + $0x118] sm:$0xff] %v374
                  %v376 = vld [vmem:[%s302 + $0x220] sm:$0xff]
                  %377 = vst [vmem:[%s303 + $0x120] sm:$0xff] %v376
                  %v378 = vld [vmem:[%s302 + $0x228] sm:$0xff]
                  %379 = vst [vmem:[%s303 + $0x128] sm:$0xff] %v378
                  %v380 = vld [vmem:[%s302 + $0x230] sm:$0xff]
                  %381 = vst [vmem:[%s303 + $0x130] sm:$0xff] %v380
                  %v382 = vld [vmem:[%s302 + $0x238] sm:$0xff]
                  %383 = vst [vmem:[%s303 + $0x138] sm:$0xff] %v382
                  %v384 = vld [vmem:[%s302 + $0x280] sm:$0xff]
                  %385 = vst [vmem:[%s303 + $0x140] sm:$0xff] %v384
                  %v386 = vld [vmem:[%s302 + $0x288] sm:$0xff]
                  %387 = vst [vmem:[%s303 + $0x148] sm:$0xff] %v386
                  %v388 = vld [vmem:[%s302 + $0x290] sm:$0xff]
                  %389 = vst [vmem:[%s303 + $0x150] sm:$0xff] %v388
                  %v390 = vld [vmem:[%s302 + $0x298] sm:$0xff]
                  %391 = vst [vmem:[%s303 + $0x158] sm:$0xff] %v390
                  %v392 = vld [vmem:[%s302 + $0x2a0] sm:$0xff]
                  %393 = vst [vmem:[%s303 + $0x160] sm:$0xff] %v392
                  %v394 = vld [vmem:[%s302 + $0x2a8] sm:$0xff]
                  %395 = vst [vmem:[%s303 + $0x168] sm:$0xff] %v394
                  %v396 = vld [vmem:[%s302 + $0x2b0] sm:$0xff]
                  %397 = vst [vmem:[%s303 + $0x170] sm:$0xff] %v396
                  %v398 = vld [vmem:[%s302 + $0x2b8] sm:$0xff]
                  %399 = vst [vmem:[%s303 + $0x178] sm:$0xff] %v398
                $region56: #{_pair_math_device.1} parent=50 // loop_footer
                  %s301 = sadd.s32 1, %s297
                $region57: #{_pair_math_device.1} parent=50 // loop_footer_branch
                  %296 = sbr.rel target = $region53
                $region58: #{_pair_math_device.1} parent=50 // loop_exit
                  _
              $region51: #{_pair_math_device.1} parent=35 // pred_fallthru
                _
              // Predicated region
              $region59: #{_pair_math_device.1} parent=35 // pred_check
                _
              $region60: #{_pair_math_device.1} parent=35 // pred_check_branch
                %401 = sbr.rel target = $region62
              $region61: #{_pair_math_device.1} parent=35 // pred_region
                _
              $region62: #{_pair_math_device.1} parent=35 // pred_fallthru
                _
            $region36: #{_pair_math_device.1} parent=31 // pred_fallthru
              _
            // Predicated region
            $region37: #{_pair_math_device.1} parent=31 // pred_check
              _
            $region38: #{_pair_math_device.1} parent=31 // pred_check_branch
              %188 = sbr.rel target = $region40
            $region39: #{_pair_math_device.1} parent=31 // pred_region
              loop: start=0, step=1, limit=1
              $region41: #{_pair_math_device.1} parent=39 // loop_pre_header
                _
              $region42: #{_pair_math_device.1} parent=39 // loop_header
                %s191 = sphi 0, %s195
                %p192 = scmp.ge.s32.totalorder %s191, 1
                %s196 = sphi %s182, %s182
                %s197 = sphi %s179, %s179
              $region43: #{_pair_math_device.1} parent=39 // loop_header_branch
                %194 = sbr.rel (%p192) target = $region47
              $region44: #{_pair_math_device.1} parent=39 // loop_body
                %v198 = vld [vmem:[%s196] sm:$0xff]
                %199 = vst [vmem:[%s197] sm:$0xff] %v198
                %v200 = vld [vmem:[%s196 + $0x8] sm:$0xff]
                %201 = vst [vmem:[%s197 + $0x8] sm:$0xff] %v200
                %v202 = vld [vmem:[%s196 + $0x10] sm:$0xff]
                %203 = vst [vmem:[%s197 + $0x10] sm:$0xff] %v202
                %v204 = vld [vmem:[%s196 + $0x18] sm:$0xff]
                %205 = vst [vmem:[%s197 + $0x18] sm:$0xff] %v204
                %v206 = vld [vmem:[%s196 + $0x20] sm:$0xff]
                %207 = vst [vmem:[%s197 + $0x20] sm:$0xff] %v206
                %v208 = vld [vmem:[%s196 + $0x28] sm:$0xff]
                %209 = vst [vmem:[%s197 + $0x28] sm:$0xff] %v208
                %v210 = vld [vmem:[%s196 + $0x30] sm:$0xff]
                %211 = vst [vmem:[%s197 + $0x30] sm:$0xff] %v210
                %v212 = vld [vmem:[%s196 + $0x38] sm:$0xff]
                %213 = vst [vmem:[%s197 + $0x38] sm:$0xff] %v212
                %v214 = vld [vmem:[%s196 + $0x80] sm:$0xff]
                %215 = vst [vmem:[%s197 + $0x40] sm:$0xff] %v214
                %v216 = vld [vmem:[%s196 + $0x88] sm:$0xff]
                %217 = vst [vmem:[%s197 + $0x48] sm:$0xff] %v216
                %v218 = vld [vmem:[%s196 + $0x90] sm:$0xff]
                %219 = vst [vmem:[%s197 + $0x50] sm:$0xff] %v218
                %v220 = vld [vmem:[%s196 + $0x98] sm:$0xff]
                %221 = vst [vmem:[%s197 + $0x58] sm:$0xff] %v220
                %v222 = vld [vmem:[%s196 + $0xa0] sm:$0xff]
                %223 = vst [vmem:[%s197 + $0x60] sm:$0xff] %v222
                %v224 = vld [vmem:[%s196 + $0xa8] sm:$0xff]
                %225 = vst [vmem:[%s197 + $0x68] sm:$0xff] %v224
                %v226 = vld [vmem:[%s196 + $0xb0] sm:$0xff]
                %227 = vst [vmem:[%s197 + $0x70] sm:$0xff] %v226
                %v228 = vld [vmem:[%s196 + $0xb8] sm:$0xff]
                %229 = vst [vmem:[%s197 + $0x78] sm:$0xff] %v228
                %v230 = vld [vmem:[%s196 + $0x100] sm:$0xff]
                %231 = vst [vmem:[%s197 + $0x80] sm:$0xff] %v230
                %v232 = vld [vmem:[%s196 + $0x108] sm:$0xff]
                %233 = vst [vmem:[%s197 + $0x88] sm:$0xff] %v232
                %v234 = vld [vmem:[%s196 + $0x110] sm:$0xff]
                %235 = vst [vmem:[%s197 + $0x90] sm:$0xff] %v234
                %v236 = vld [vmem:[%s196 + $0x118] sm:$0xff]
                %237 = vst [vmem:[%s197 + $0x98] sm:$0xff] %v236
                %v238 = vld [vmem:[%s196 + $0x120] sm:$0xff]
                %239 = vst [vmem:[%s197 + $0xa0] sm:$0xff] %v238
                %v240 = vld [vmem:[%s196 + $0x128] sm:$0xff]
                %241 = vst [vmem:[%s197 + $0xa8] sm:$0xff] %v240
                %v242 = vld [vmem:[%s196 + $0x130] sm:$0xff]
                %243 = vst [vmem:[%s197 + $0xb0] sm:$0xff] %v242
                %v244 = vld [vmem:[%s196 + $0x138] sm:$0xff]
                %245 = vst [vmem:[%s197 + $0xb8] sm:$0xff] %v244
                %v246 = vld [vmem:[%s196 + $0x180] sm:$0xff]
                %247 = vst [vmem:[%s197 + $0xc0] sm:$0xff] %v246
                %v248 = vld [vmem:[%s196 + $0x188] sm:$0xff]
                %249 = vst [vmem:[%s197 + $0xc8] sm:$0xff] %v248
                %v250 = vld [vmem:[%s196 + $0x190] sm:$0xff]
                %251 = vst [vmem:[%s197 + $0xd0] sm:$0xff] %v250
                %v252 = vld [vmem:[%s196 + $0x198] sm:$0xff]
                %253 = vst [vmem:[%s197 + $0xd8] sm:$0xff] %v252
                %v254 = vld [vmem:[%s196 + $0x1a0] sm:$0xff]
                %255 = vst [vmem:[%s197 + $0xe0] sm:$0xff] %v254
                %v256 = vld [vmem:[%s196 + $0x1a8] sm:$0xff]
                %257 = vst [vmem:[%s197 + $0xe8] sm:$0xff] %v256
                %v258 = vld [vmem:[%s196 + $0x1b0] sm:$0xff]
                %259 = vst [vmem:[%s197 + $0xf0] sm:$0xff] %v258
                %v260 = vld [vmem:[%s196 + $0x1b8] sm:$0xff]
                %261 = vst [vmem:[%s197 + $0xf8] sm:$0xff] %v260
                %v262 = vld [vmem:[%s196 + $0x200] sm:$0xff]
                %263 = vst [vmem:[%s197 + $0x100] sm:$0xff] %v262
                %v264 = vld [vmem:[%s196 + $0x208] sm:$0xff]
                %265 = vst [vmem:[%s197 + $0x108] sm:$0xff] %v264
                %v266 = vld [vmem:[%s196 + $0x210] sm:$0xff]
                %267 = vst [vmem:[%s197 + $0x110] sm:$0xff] %v266
                %v268 = vld [vmem:[%s196 + $0x218] sm:$0xff]
                %269 = vst [vmem:[%s197 + $0x118] sm:$0xff] %v268
                %v270 = vld [vmem:[%s196 + $0x220] sm:$0xff]
                %271 = vst [vmem:[%s197 + $0x120] sm:$0xff] %v270
                %v272 = vld [vmem:[%s196 + $0x228] sm:$0xff]
                %273 = vst [vmem:[%s197 + $0x128] sm:$0xff] %v272
                %v274 = vld [vmem:[%s196 + $0x230] sm:$0xff]
                %275 = vst [vmem:[%s197 + $0x130] sm:$0xff] %v274
                %v276 = vld [vmem:[%s196 + $0x238] sm:$0xff]
                %277 = vst [vmem:[%s197 + $0x138] sm:$0xff] %v276
                %v278 = vld [vmem:[%s196 + $0x280] sm:$0xff]
                %279 = vst [vmem:[%s197 + $0x140] sm:$0xff] %v278
                %v280 = vld [vmem:[%s196 + $0x288] sm:$0xff]
                %281 = vst [vmem:[%s197 + $0x148] sm:$0xff] %v280
                %v282 = vld [vmem:[%s196 + $0x290] sm:$0xff]
                %283 = vst [vmem:[%s197 + $0x150] sm:$0xff] %v282
                %v284 = vld [vmem:[%s196 + $0x298] sm:$0xff]
                %285 = vst [vmem:[%s197 + $0x158] sm:$0xff] %v284
                %v286 = vld [vmem:[%s196 + $0x2a0] sm:$0xff]
                %287 = vst [vmem:[%s197 + $0x160] sm:$0xff] %v286
                %v288 = vld [vmem:[%s196 + $0x2a8] sm:$0xff]
                %289 = vst [vmem:[%s197 + $0x168] sm:$0xff] %v288
                %v290 = vld [vmem:[%s196 + $0x2b0] sm:$0xff]
                %291 = vst [vmem:[%s197 + $0x170] sm:$0xff] %v290
                %v292 = vld [vmem:[%s196 + $0x2b8] sm:$0xff]
                %293 = vst [vmem:[%s197 + $0x178] sm:$0xff] %v292
              $region45: #{_pair_math_device.1} parent=39 // loop_footer
                %s195 = sadd.s32 1, %s191
              $region46: #{_pair_math_device.1} parent=39 // loop_footer_branch
                %190 = sbr.rel target = $region42
              $region47: #{_pair_math_device.1} parent=39 // loop_exit
                _
            $region40: #{_pair_math_device.1} parent=31 // pred_fallthru
              _
          $region32: #{_pair_math_device.1} parent=27 // pred_fallthru
            _
          %402 = vnop
        $region28: #{_pair_math_device.1} parent=23 // pred_fallthru
          _
        // Predicated region
        $region63: #{_pair_math_device.1} parent=23 // pred_check
          %p403 = pneg %p100
        $region64: #{_pair_math_device.1} parent=23 // pred_check_branch
          %405 = sbr.rel (%p403) target = $region66
        $region65: #{_pair_math_device.1} parent=23 // pred_region
          %s406 = smul.u32 8, %s12
          %p407 = scmp.lt.s32.totalorder %s406, 15
          %s408 = scalar_select %p407, %s406, 15
          %s409 = smul.addr %s408, 8
          %s410 = scalar_lea.vmem %s3, %s409
          %s411 = smul.u32 8, %s12
        $region66: #{_pair_math_device.1} parent=23 // pred_fallthru
          _
      $region24: #{_pair_math_device.1} parent=5 // pred_fallthru
        _
      %p412 = scmp.le.s32.totalorder 1, %s12
      %p413 = scmp.lt.s32.totalorder %s12, 3
      %p414 = pnand %p412, %p413
      %p415 = pneg %p414
      // Predicated region
      $region67: #{_pair_math_device.1} parent=5 // pred_check
        _
      $region68: #{_pair_math_device.1} parent=5 // pred_check_branch
        %417 = sbr.rel (%p414) target = $region70
      $region69: #{_pair_math_device.1} parent=5 // pred_region
        %s418 = ssub.s32 %s12, 1
        // Predicated region
        $region71: #{_pair_math_device.1} parent=69 // pred_check
          %p419 = pneg %p33
        $region72: #{_pair_math_device.1} parent=69 // pred_check_branch
          %421 = sbr.rel (%p419) target = $region74
        $region73: #{_pair_math_device.1} parent=69 // pred_region
          %422 = dma.done [#allocation3], 16
        $region74: #{_pair_math_device.1} parent=69 // pred_fallthru
          _
        // Predicated region
        $region75: #{_pair_math_device.1} parent=69 // pred_check
          %p423 = pneg %p54
        $region76: #{_pair_math_device.1} parent=69 // pred_check_branch
          %425 = sbr.rel (%p423) target = $region78
        $region77: #{_pair_math_device.1} parent=69 // pred_region
          %426 = dma.done [#allocation5], 16
        $region78: #{_pair_math_device.1} parent=69 // pred_fallthru
          _
        %s427 = sand.u32 %s67, 1
        %s428 = sand.u32 %s67, 1
        %s429 = smul.addr %s428, 384
        %s430 = scalar_lea.vmem [#allocation6], %s429
        // Predicated region
        $region79: #{_pair_math_device.1} parent=69 // pred_check
          %p431 = pneg %p80
        $region80: #{_pair_math_device.1} parent=69 // pred_check_branch
          %433 = sbr.rel (%p431) target = $region82
        $region81: #{_pair_math_device.1} parent=69 // pred_region
          _
        $region82: #{_pair_math_device.1} parent=69 // pred_fallthru
          _
        %434 = sfence
        %p435 = pneg %p33
        %p436 = pneg %p30
        %p437 = pneg %p54
        %p438 = pneg %p51
        %s439 = sand.u32 %s67, 1
        %s440 = sand.u32 %s67, 1
        %s441 = smul.addr %s440, 384
        %s442 = scalar_lea.vmem [#allocation6], %s441
        %p443 = pneg %p80
        %p444 = pneg %p77
        %s445 = smul.u32 8, %s17
        %p446 = scmp.lt.s32.totalorder %s445, 15
        %s447 = scalar_select %p446, %s445, 15
        %s448 = smul.addr %s447, 8
        %s449 = scalar_lea.vmem %s3, %s448
        %p450 = pneg %p106
        %p451 = pneg %p103
        %p452 = pneg %p132
        %p453 = pneg %p129
        %s454 = sand.u32 %s119, 1
        %s455 = sand.u32 %s119, 1
        %s456 = smul.addr %s455, 256
        %s457 = scalar_lea.vmem [#allocation7], %s456
        %s458 = smul.u32 8, %s17
        %s459 = smul.u32 8, %s17
        %p460 = scmp.lt.s32.totalorder %s459, 15
        %s461 = scalar_select %p460, %s459, 15
        %s462 = smul.addr %s461, 8
        %s463 = scalar_lea.vmem %s3, %s462
        %s464 = smul.u32 8, %s17
        %s465 = smul.u32 8, %s17
        %s466 = sld [smem:[#allocation2 + %s17]]
        %s467 = smul.u32 %s466, 9
        %v468 = vld [vmem:[%s463] sm:$0xff]
        %v469 = vld [vmem:[%s463 + $0x8] sm:$0xff]
        %v470 = vld [vmem:[%s463 + $0x10] sm:$0xff]
        %v471 = vld [vmem:[%s463 + $0x18] sm:$0xff]
        %v472 = vld [vmem:[%s463 + $0x20] sm:$0xff]
        %v473 = vld [vmem:[%s463 + $0x28] sm:$0xff]
        %v474 = vld [vmem:[%s463 + $0x30] sm:$0xff]
        %v475 = vld [vmem:[%s463 + $0x38] sm:$0xff]
        %v476 = vand.u32 %v468, 255
        %v477 = vand.u32 %v469, 255
        %v478 = vand.u32 %v470, 255
        %v479 = vand.u32 %v471, 255
        %v480 = vand.u32 %v472, 255
        %v481 = vand.u32 %v473, 255
        %v482 = vand.u32 %v474, 255
        %v483 = vand.u32 %v475, 255
        %v484 = vsub.s32 %v476, 128
        %v485 = vsub.s32 %v477, 128
        %v486 = vsub.s32 %v478, 128
        %v487 = vsub.s32 %v479, 128
        %v488 = vsub.s32 %v480, 128
        %v489 = vsub.s32 %v481, 128
        %v490 = vsub.s32 %v482, 128
        %v491 = vsub.s32 %v483, 128
        %v492 = vcvt.s32.f32 %v484
        %v493 = vcvt.s32.f32 %v485
        %v494 = vcvt.s32.f32 %v486
        %v495 = vcvt.s32.f32 %v487
        %v496 = vcvt.s32.f32 %v488
        %v497 = vcvt.s32.f32 %v489
        %v498 = vcvt.s32.f32 %v490
        %v499 = vcvt.s32.f32 %v491
        %v500 = vshra.s32 %v468, 8
        %v501 = vshra.s32 %v469, 8
        %v502 = vshra.s32 %v470, 8
        %v503 = vshra.s32 %v471, 8
        %v504 = vshra.s32 %v472, 8
        %v505 = vshra.s32 %v473, 8
        %v506 = vshra.s32 %v474, 8
        %v507 = vshra.s32 %v475, 8
        %v508 = vand.u32 %v500, 255
        %v509 = vand.u32 %v501, 255
        %v510 = vand.u32 %v502, 255
        %v511 = vand.u32 %v503, 255
        %v512 = vand.u32 %v504, 255
        %v513 = vand.u32 %v505, 255
        %v514 = vand.u32 %v506, 255
        %v515 = vand.u32 %v507, 255
        %v516 = vsub.s32 %v508, 128
        %v517 = vsub.s32 %v509, 128
        %v518 = vsub.s32 %v510, 128
        %v519 = vsub.s32 %v511, 128
        %v520 = vsub.s32 %v512, 128
        %v521 = vsub.s32 %v513, 128
        %v522 = vsub.s32 %v514, 128
        %v523 = vsub.s32 %v515, 128
        %v524 = vcvt.s32.f32 %v516
        %v525 = vcvt.s32.f32 %v517
        %v526 = vcvt.s32.f32 %v518
        %v527 = vcvt.s32.f32 %v519
        %v528 = vcvt.s32.f32 %v520
        %v529 = vcvt.s32.f32 %v521
        %v530 = vcvt.s32.f32 %v522
        %v531 = vcvt.s32.f32 %v523
        %v532 = vshra.s32 %v468, 16
        %v533 = vshra.s32 %v469, 16
        %v534 = vshra.s32 %v470, 16
        %v535 = vshra.s32 %v471, 16
        %v536 = vshra.s32 %v472, 16
        %v537 = vshra.s32 %v473, 16
        %v538 = vshra.s32 %v474, 16
        %v539 = vshra.s32 %v475, 16
        %v540 = vand.u32 %v532, 255
        %v541 = vand.u32 %v533, 255
        %v542 = vand.u32 %v534, 255
        %v543 = vand.u32 %v535, 255
        %v544 = vand.u32 %v536, 255
        %v545 = vand.u32 %v537, 255
        %v546 = vand.u32 %v538, 255
        %v547 = vand.u32 %v539, 255
        %v548 = vsub.s32 %v540, 128
        %v549 = vsub.s32 %v541, 128
        %v550 = vsub.s32 %v542, 128
        %v551 = vsub.s32 %v543, 128
        %v552 = vsub.s32 %v544, 128
        %v553 = vsub.s32 %v545, 128
        %v554 = vsub.s32 %v546, 128
        %v555 = vsub.s32 %v547, 128
        %v556 = vcvt.s32.f32 %v548
        %v557 = vcvt.s32.f32 %v549
        %v558 = vcvt.s32.f32 %v550
        %v559 = vcvt.s32.f32 %v551
        %v560 = vcvt.s32.f32 %v552
        %v561 = vcvt.s32.f32 %v553
        %v562 = vcvt.s32.f32 %v554
        %v563 = vcvt.s32.f32 %v555
        %s564 = sld [smem:[#allocation4 + %s467]]
        %v565 = vstv %s564
        %v566 = vmul.f32 %v492, %v565
        %v567 = vmul.f32 %v493, %v565
        %v568 = vmul.f32 %v494, %v565
        %v569 = vmul.f32 %v495, %v565
        %v570 = vmul.f32 %v496, %v565
        %v571 = vmul.f32 %v497, %v565
        %v572 = vmul.f32 %v498, %v565
        %v573 = vmul.f32 %v499, %v565
        %s574 = sadd.s32 %s467, 3
        %s575 = sld [smem:[#allocation4 + %s574]]
        %v576 = vstv %s575
        %v577 = vmul.f32 %v524, %v576
        %v578 = vmul.f32 %v525, %v576
        %v579 = vmul.f32 %v526, %v576
        %v580 = vmul.f32 %v527, %v576
        %v581 = vmul.f32 %v528, %v576
        %v582 = vmul.f32 %v529, %v576
        %v583 = vmul.f32 %v530, %v576
        %v584 = vmul.f32 %v531, %v576
        %v585 = vadd.f32 %v566, %v577
        %v586 = vadd.f32 %v567, %v578
        %v587 = vadd.f32 %v568, %v579
        %v588 = vadd.f32 %v569, %v580
        %v589 = vadd.f32 %v570, %v581
        %v590 = vadd.f32 %v571, %v582
        %v591 = vadd.f32 %v572, %v583
        %v592 = vadd.f32 %v573, %v584
        %s593 = sadd.s32 %s467, 6
        %s594 = sld [smem:[#allocation4 + %s593]]
        %v595 = vstv %s594
        %v596 = vmul.f32 %v556, %v595
        %v597 = vmul.f32 %v557, %v595
        %v598 = vmul.f32 %v558, %v595
        %v599 = vmul.f32 %v559, %v595
        %v600 = vmul.f32 %v560, %v595
        %v601 = vmul.f32 %v561, %v595
        %v602 = vmul.f32 %v562, %v595
        %v603 = vmul.f32 %v563, %v595
        %v604 = vadd.f32 %v585, %v596
        %v605 = vadd.f32 %v586, %v597
        %v606 = vadd.f32 %v587, %v598
        %v607 = vadd.f32 %v588, %v599
        %v608 = vadd.f32 %v589, %v600
        %v609 = vadd.f32 %v590, %v601
        %v610 = vadd.f32 %v591, %v602
        %v611 = vadd.f32 %v592, %v603
        %v612 = vld [vmem:[%s430] sm:$0xff]
        %v613 = vld [vmem:[%s430 + $0x8] sm:$0xff]
        %v614 = vld [vmem:[%s430 + $0x10] sm:$0xff]
        %v615 = vld [vmem:[%s430 + $0x18] sm:$0xff]
        %v616 = vld [vmem:[%s430 + $0x20] sm:$0xff]
        %v617 = vld [vmem:[%s430 + $0x28] sm:$0xff]
        %v618 = vld [vmem:[%s430 + $0x30] sm:$0xff]
        %v619 = vld [vmem:[%s430 + $0x38] sm:$0xff]
        %s620 = scalar_lea.vmem %s430, 192 [#allocation6]
        %v621 = vld [vmem:[%s620] sm:$0xff]
        %v622 = vld [vmem:[%s620 + $0x8] sm:$0xff]
        %v623 = vld [vmem:[%s620 + $0x10] sm:$0xff]
        %v624 = vld [vmem:[%s620 + $0x18] sm:$0xff]
        %v625 = vld [vmem:[%s620 + $0x20] sm:$0xff]
        %v626 = vld [vmem:[%s620 + $0x28] sm:$0xff]
        %v627 = vld [vmem:[%s620 + $0x30] sm:$0xff]
        %v628 = vld [vmem:[%s620 + $0x38] sm:$0xff]
        %v629 = vsub.f32 %v612, %v621
        %v630 = vsub.f32 %v613, %v622
        %v631 = vsub.f32 %v614, %v623
        %v632 = vsub.f32 %v615, %v624
        %v633 = vsub.f32 %v616, %v625
        %v634 = vsub.f32 %v617, %v626
        %v635 = vsub.f32 %v618, %v627
        %v636 = vsub.f32 %v619, %v628
        %v637 = vadd.f32 %v629, %v604
        %v638 = vadd.f32 %v630, %v605
        %v639 = vadd.f32 %v631, %v606
        %v640 = vadd.f32 %v632, %v607
        %v641 = vadd.f32 %v633, %v608
        %v642 = vadd.f32 %v634, %v609
        %v643 = vadd.f32 %v635, %v610
        %v644 = vadd.f32 %v636, %v611
        %645 = vst [vmem:[%s457] sm:$0xff] %v637
        %646 = vst [vmem:[%s457 + $0x8] sm:$0xff] %v638
        %647 = vst [vmem:[%s457 + $0x10] sm:$0xff] %v639
        %648 = vst [vmem:[%s457 + $0x18] sm:$0xff] %v640
        %649 = vst [vmem:[%s457 + $0x20] sm:$0xff] %v641
        %650 = vst [vmem:[%s457 + $0x28] sm:$0xff] %v642
        %651 = vst [vmem:[%s457 + $0x30] sm:$0xff] %v643
        %652 = vst [vmem:[%s457 + $0x38] sm:$0xff] %v644
        %v653 = vmul.f32 %v637, %v637
        %v654 = vmul.f32 %v638, %v638
        %v655 = vmul.f32 %v639, %v639
        %v656 = vmul.f32 %v640, %v640
        %v657 = vmul.f32 %v641, %v641
        %v658 = vmul.f32 %v642, %v642
        %v659 = vmul.f32 %v643, %v643
        %v660 = vmul.f32 %v644, %v644
        %s661 = sadd.s32 %s467, 1
        %s662 = sld [smem:[#allocation4 + %s661]]
        %v663 = vstv %s662
        %v664 = vmul.f32 %v492, %v663
        %v665 = vmul.f32 %v493, %v663
        %v666 = vmul.f32 %v494, %v663
        %v667 = vmul.f32 %v495, %v663
        %v668 = vmul.f32 %v496, %v663
        %v669 = vmul.f32 %v497, %v663
        %v670 = vmul.f32 %v498, %v663
        %v671 = vmul.f32 %v499, %v663
        %s672 = sadd.s32 %s467, 4
        %s673 = sld [smem:[#allocation4 + %s672]]
        %v674 = vstv %s673
        %v675 = vmul.f32 %v524, %v674
        %v676 = vmul.f32 %v525, %v674
        %v677 = vmul.f32 %v526, %v674
        %v678 = vmul.f32 %v527, %v674
        %v679 = vmul.f32 %v528, %v674
        %v680 = vmul.f32 %v529, %v674
        %v681 = vmul.f32 %v530, %v674
        %v682 = vmul.f32 %v531, %v674
        %v683 = vadd.f32 %v664, %v675
        %v684 = vadd.f32 %v665, %v676
        %v685 = vadd.f32 %v666, %v677
        %v686 = vadd.f32 %v667, %v678
        %v687 = vadd.f32 %v668, %v679
        %v688 = vadd.f32 %v669, %v680
        %v689 = vadd.f32 %v670, %v681
        %v690 = vadd.f32 %v671, %v682
        %s691 = sadd.s32 %s467, 7
        %s692 = sld [smem:[#allocation4 + %s691]]
        %v693 = vstv %s692
        %v694 = vmul.f32 %v556, %v693
        %v695 = vmul.f32 %v557, %v693
        %v696 = vmul.f32 %v558, %v693
        %v697 = vmul.f32 %v559, %v693
        %v698 = vmul.f32 %v560, %v693
        %v699 = vmul.f32 %v561, %v693
        %v700 = vmul.f32 %v562, %v693
        %v701 = vmul.f32 %v563, %v693
        %v702 = vadd.f32 %v683, %v694
        %v703 = vadd.f32 %v684, %v695
        %v704 = vadd.f32 %v685, %v696
        %v705 = vadd.f32 %v686, %v697
        %v706 = vadd.f32 %v687, %v698
        %v707 = vadd.f32 %v688, %v699
        %v708 = vadd.f32 %v689, %v700
        %v709 = vadd.f32 %v690, %v701
        %s710 = scalar_lea.vmem %s430, 64 [#allocation6]
        %v711 = vld [vmem:[%s710] sm:$0xff]
        %v712 = vld [vmem:[%s710 + $0x8] sm:$0xff]
        %v713 = vld [vmem:[%s710 + $0x10] sm:$0xff]
        %v714 = vld [vmem:[%s710 + $0x18] sm:$0xff]
        %v715 = vld [vmem:[%s710 + $0x20] sm:$0xff]
        %v716 = vld [vmem:[%s710 + $0x28] sm:$0xff]
        %v717 = vld [vmem:[%s710 + $0x30] sm:$0xff]
        %v718 = vld [vmem:[%s710 + $0x38] sm:$0xff]
        %s719 = scalar_lea.vmem %s430, 256 [#allocation6]
        %v720 = vld [vmem:[%s719] sm:$0xff]
        %v721 = vld [vmem:[%s719 + $0x8] sm:$0xff]
        %v722 = vld [vmem:[%s719 + $0x10] sm:$0xff]
        %v723 = vld [vmem:[%s719 + $0x18] sm:$0xff]
        %v724 = vld [vmem:[%s719 + $0x20] sm:$0xff]
        %v725 = vld [vmem:[%s719 + $0x28] sm:$0xff]
        %v726 = vld [vmem:[%s719 + $0x30] sm:$0xff]
        %v727 = vld [vmem:[%s719 + $0x38] sm:$0xff]
        %v728 = vsub.f32 %v711, %v720
        %v729 = vsub.f32 %v712, %v721
        %v730 = vsub.f32 %v713, %v722
        %v731 = vsub.f32 %v714, %v723
        %v732 = vsub.f32 %v715, %v724
        %v733 = vsub.f32 %v716, %v725
        %v734 = vsub.f32 %v717, %v726
        %v735 = vsub.f32 %v718, %v727
        %v736 = vadd.f32 %v728, %v702
        %v737 = vadd.f32 %v729, %v703
        %v738 = vadd.f32 %v730, %v704
        %v739 = vadd.f32 %v731, %v705
        %v740 = vadd.f32 %v732, %v706
        %v741 = vadd.f32 %v733, %v707
        %v742 = vadd.f32 %v734, %v708
        %v743 = vadd.f32 %v735, %v709
        %s744 = scalar_lea.vmem %s457, 64 [#allocation7]
        %745 = vst [vmem:[%s744] sm:$0xff] %v736
        %746 = vst [vmem:[%s744 + $0x8] sm:$0xff] %v737
        %747 = vst [vmem:[%s744 + $0x10] sm:$0xff] %v738
        %748 = vst [vmem:[%s744 + $0x18] sm:$0xff] %v739
        %749 = vst [vmem:[%s744 + $0x20] sm:$0xff] %v740
        %750 = vst [vmem:[%s744 + $0x28] sm:$0xff] %v741
        %751 = vst [vmem:[%s744 + $0x30] sm:$0xff] %v742
        %752 = vst [vmem:[%s744 + $0x38] sm:$0xff] %v743
        %v753 = vmul.f32 %v736, %v736
        %v754 = vmul.f32 %v737, %v737
        %v755 = vmul.f32 %v738, %v738
        %v756 = vmul.f32 %v739, %v739
        %v757 = vmul.f32 %v740, %v740
        %v758 = vmul.f32 %v741, %v741
        %v759 = vmul.f32 %v742, %v742
        %v760 = vmul.f32 %v743, %v743
        %v761 = vadd.f32 %v653, %v753
        %v762 = vadd.f32 %v654, %v754
        %v763 = vadd.f32 %v655, %v755
        %v764 = vadd.f32 %v656, %v756
        %v765 = vadd.f32 %v657, %v757
        %v766 = vadd.f32 %v658, %v758
        %v767 = vadd.f32 %v659, %v759
        %v768 = vadd.f32 %v660, %v760
        %s769 = sadd.s32 %s467, 2
        %s770 = sld [smem:[#allocation4 + %s769]]
        %v771 = vstv %s770
        %v772 = vmul.f32 %v492, %v771
        %v773 = vmul.f32 %v493, %v771
        %v774 = vmul.f32 %v494, %v771
        %v775 = vmul.f32 %v495, %v771
        %v776 = vmul.f32 %v496, %v771
        %v777 = vmul.f32 %v497, %v771
        %v778 = vmul.f32 %v498, %v771
        %v779 = vmul.f32 %v499, %v771
        %s780 = sadd.s32 %s467, 5
        %s781 = sld [smem:[#allocation4 + %s780]]
        %v782 = vstv %s781
        %v783 = vmul.f32 %v524, %v782
        %v784 = vmul.f32 %v525, %v782
        %v785 = vmul.f32 %v526, %v782
        %v786 = vmul.f32 %v527, %v782
        %v787 = vmul.f32 %v528, %v782
        %v788 = vmul.f32 %v529, %v782
        %v789 = vmul.f32 %v530, %v782
        %v790 = vmul.f32 %v531, %v782
        %v791 = vadd.f32 %v772, %v783
        %v792 = vadd.f32 %v773, %v784
        %v793 = vadd.f32 %v774, %v785
        %v794 = vadd.f32 %v775, %v786
        %v795 = vadd.f32 %v776, %v787
        %v796 = vadd.f32 %v777, %v788
        %v797 = vadd.f32 %v778, %v789
        %v798 = vadd.f32 %v779, %v790
        %s799 = sadd.s32 %s467, 8
        %s800 = sld [smem:[#allocation4 + %s799]]
        %v801 = vstv %s800
        %v802 = vmul.f32 %v556, %v801
        %v803 = vmul.f32 %v557, %v801
        %v804 = vmul.f32 %v558, %v801
        %v805 = vmul.f32 %v559, %v801
        %v806 = vmul.f32 %v560, %v801
        %v807 = vmul.f32 %v561, %v801
        %v808 = vmul.f32 %v562, %v801
        %v809 = vmul.f32 %v563, %v801
        %v810 = vadd.f32 %v791, %v802
        %v811 = vadd.f32 %v792, %v803
        %v812 = vadd.f32 %v793, %v804
        %v813 = vadd.f32 %v794, %v805
        %v814 = vadd.f32 %v795, %v806
        %v815 = vadd.f32 %v796, %v807
        %v816 = vadd.f32 %v797, %v808
        %v817 = vadd.f32 %v798, %v809
        %s818 = scalar_lea.vmem %s430, 128 [#allocation6]
        %v819 = vld [vmem:[%s818] sm:$0xff]
        %v820 = vld [vmem:[%s818 + $0x8] sm:$0xff]
        %v821 = vld [vmem:[%s818 + $0x10] sm:$0xff]
        %v822 = vld [vmem:[%s818 + $0x18] sm:$0xff]
        %v823 = vld [vmem:[%s818 + $0x20] sm:$0xff]
        %v824 = vld [vmem:[%s818 + $0x28] sm:$0xff]
        %v825 = vld [vmem:[%s818 + $0x30] sm:$0xff]
        %v826 = vld [vmem:[%s818 + $0x38] sm:$0xff]
        %s827 = scalar_lea.vmem %s430, 320 [#allocation6]
        %v828 = vld [vmem:[%s827] sm:$0xff]
        %v829 = vld [vmem:[%s827 + $0x8] sm:$0xff]
        %v830 = vld [vmem:[%s827 + $0x10] sm:$0xff]
        %v831 = vld [vmem:[%s827 + $0x18] sm:$0xff]
        %v832 = vld [vmem:[%s827 + $0x20] sm:$0xff]
        %v833 = vld [vmem:[%s827 + $0x28] sm:$0xff]
        %v834 = vld [vmem:[%s827 + $0x30] sm:$0xff]
        %v835 = vld [vmem:[%s827 + $0x38] sm:$0xff]
        %v836 = vsub.f32 %v819, %v828
        %v837 = vsub.f32 %v820, %v829
        %v838 = vsub.f32 %v821, %v830
        %v839 = vsub.f32 %v822, %v831
        %v840 = vsub.f32 %v823, %v832
        %v841 = vsub.f32 %v824, %v833
        %v842 = vsub.f32 %v825, %v834
        %v843 = vsub.f32 %v826, %v835
        %v844 = vadd.f32 %v836, %v810
        %v845 = vadd.f32 %v837, %v811
        %v846 = vadd.f32 %v838, %v812
        %v847 = vadd.f32 %v839, %v813
        %v848 = vadd.f32 %v840, %v814
        %v849 = vadd.f32 %v841, %v815
        %v850 = vadd.f32 %v842, %v816
        %v851 = vadd.f32 %v843, %v817
        %s852 = scalar_lea.vmem %s457, 128 [#allocation7]
        %853 = vst [vmem:[%s852] sm:$0xff] %v844
        %854 = vst [vmem:[%s852 + $0x8] sm:$0xff] %v845
        %855 = vst [vmem:[%s852 + $0x10] sm:$0xff] %v846
        %856 = vst [vmem:[%s852 + $0x18] sm:$0xff] %v847
        %857 = vst [vmem:[%s852 + $0x20] sm:$0xff] %v848
        %858 = vst [vmem:[%s852 + $0x28] sm:$0xff] %v849
        %859 = vst [vmem:[%s852 + $0x30] sm:$0xff] %v850
        %860 = vst [vmem:[%s852 + $0x38] sm:$0xff] %v851
        %v861 = vmul.f32 %v844, %v844
        %v862 = vmul.f32 %v845, %v845
        %v863 = vmul.f32 %v846, %v846
        %v864 = vmul.f32 %v847, %v847
        %v865 = vmul.f32 %v848, %v848
        %v866 = vmul.f32 %v849, %v849
        %v867 = vmul.f32 %v850, %v850
        %v868 = vmul.f32 %v851, %v851
        %v869 = vadd.f32 %v761, %v861
        %v870 = vadd.f32 %v762, %v862
        %v871 = vadd.f32 %v763, %v863
        %v872 = vadd.f32 %v764, %v864
        %v873 = vadd.f32 %v765, %v865
        %v874 = vadd.f32 %v766, %v866
        %v875 = vadd.f32 %v767, %v867
        %v876 = vadd.f32 %v768, %v868
        %v877 = vrsqrt.pop %v869
        %v878 = vmul.f32 %v869, %v877
        %vm879 = vcmp.eq.f32.partialorder %v869, inf
        %v880 = vsel %vm879, %v869, %v878
        %vm881 = vcmp.eq.f32.partialorder %v869, 0.0
        %v882 = vand.u32 %v869, 2147483648
        %v883 = vsel %vm881, %v882, %v880
        %v884 = vrsqrt.pop %v870
        %v885 = vmul.f32 %v870, %v884
        %vm886 = vcmp.eq.f32.partialorder %v870, inf
        %v887 = vsel %vm886, %v870, %v885
        %vm888 = vcmp.eq.f32.partialorder %v870, 0.0
        %v889 = vand.u32 %v870, 2147483648
        %v890 = vsel %vm888, %v889, %v887
        %v891 = vrsqrt.pop %v871
        %v892 = vmul.f32 %v871, %v891
        %vm893 = vcmp.eq.f32.partialorder %v871, inf
        %v894 = vsel %vm893, %v871, %v892
        %vm895 = vcmp.eq.f32.partialorder %v871, 0.0
        %v896 = vand.u32 %v871, 2147483648
        %v897 = vsel %vm895, %v896, %v894
        %v898 = vrsqrt.pop %v872
        %v899 = vmul.f32 %v872, %v898
        %vm900 = vcmp.eq.f32.partialorder %v872, inf
        %v901 = vsel %vm900, %v872, %v899
        %vm902 = vcmp.eq.f32.partialorder %v872, 0.0
        %v903 = vand.u32 %v872, 2147483648
        %v904 = vsel %vm902, %v903, %v901
        %v905 = vrsqrt.pop %v873
        %v906 = vmul.f32 %v873, %v905
        %vm907 = vcmp.eq.f32.partialorder %v873, inf
        %v908 = vsel %vm907, %v873, %v906
        %vm909 = vcmp.eq.f32.partialorder %v873, 0.0
        %v910 = vand.u32 %v873, 2147483648
        %v911 = vsel %vm909, %v910, %v908
        %v912 = vrsqrt.pop %v874
        %v913 = vmul.f32 %v874, %v912
        %vm914 = vcmp.eq.f32.partialorder %v874, inf
        %v915 = vsel %vm914, %v874, %v913
        %vm916 = vcmp.eq.f32.partialorder %v874, 0.0
        %v917 = vand.u32 %v874, 2147483648
        %v918 = vsel %vm916, %v917, %v915
        %v919 = vrsqrt.pop %v875
        %v920 = vmul.f32 %v875, %v919
        %vm921 = vcmp.eq.f32.partialorder %v875, inf
        %v922 = vsel %vm921, %v875, %v920
        %vm923 = vcmp.eq.f32.partialorder %v875, 0.0
        %v924 = vand.u32 %v875, 2147483648
        %v925 = vsel %vm923, %v924, %v922
        %v926 = vrsqrt.pop %v876
        %v927 = vmul.f32 %v876, %v926
        %vm928 = vcmp.eq.f32.partialorder %v876, inf
        %v929 = vsel %vm928, %v876, %v927
        %vm930 = vcmp.eq.f32.partialorder %v876, 0.0
        %v931 = vand.u32 %v876, 2147483648
        %v932 = vsel %vm930, %v931, %v929
        %s933 = scalar_lea.vmem %s457, 192 [#allocation7]
        %934 = vst [vmem:[%s933] sm:$0xff] %v883
        %935 = vst [vmem:[%s933 + $0x8] sm:$0xff] %v890
        %936 = vst [vmem:[%s933 + $0x10] sm:$0xff] %v897
        %937 = vst [vmem:[%s933 + $0x18] sm:$0xff] %v904
        %938 = vst [vmem:[%s933 + $0x20] sm:$0xff] %v911
        %939 = vst [vmem:[%s933 + $0x28] sm:$0xff] %v918
        %940 = vst [vmem:[%s933 + $0x30] sm:$0xff] %v925
        %941 = vst [vmem:[%s933 + $0x38] sm:$0xff] %v932
        %s942 = sand.u32 %s119, 1
        %s943 = sand.u32 %s119, 1
        %s944 = smul.addr %s943, 256
        %s945 = scalar_lea.vmem [#allocation7], %s944
        // Predicated region
        $region83: #{_pair_math_device.1} parent=69 // pred_check
          %p946 = pneg %p129
        $region84: #{_pair_math_device.1} parent=69 // pred_check_branch
          %948 = sbr.rel (%p946) target = $region86
        $region85: #{_pair_math_device.1} parent=69 // pred_region
          %s949 = smul.u32 8, %s17
          %s950 = smul.addr %s949, 8
          %s951 = scalar_lea.vmem %s4, %s950
          // Predicated region
          $region87: #{_pair_math_device.1} parent=85 // pred_check
            _
          $region88: #{_pair_math_device.1} parent=85 // pred_check_branch
            %953 = sbr.rel (0) target = $region90
          $region89: #{_pair_math_device.1} parent=85 // pred_region
            // Predicated region
            $region91: #{_pair_math_device.1} parent=89 // pred_check
              _
            $region92: #{_pair_math_device.1} parent=89 // pred_check_branch
              %955 = sbr.rel (0) target = $region94
            $region93: #{_pair_math_device.1} parent=89 // pred_region
              // Predicated region
              $region106: #{_pair_math_device.1} parent=93 // pred_check
                _
              $region107: #{_pair_math_device.1} parent=93 // pred_check_branch
                %1032 = sbr.rel (0) target = $region109
              $region108: #{_pair_math_device.1} parent=93 // pred_region
                loop: start=0, step=1, limit=1
                $region110: #{_pair_math_device.1} parent=108 // loop_pre_header
                  _
                $region111: #{_pair_math_device.1} parent=108 // loop_header
                  %s1034 = sphi 0, %s1038
                  %p1035 = scmp.ge.s32.totalorder %s1034, 1
                  %s1039 = sphi %s945, %s945
                  %s1040 = sphi %s951, %s951
                $region112: #{_pair_math_device.1} parent=108 // loop_header_branch
                  %1037 = sbr.rel (%p1035) target = $region116
                $region113: #{_pair_math_device.1} parent=108 // loop_body
                  %v1041 = vld [vmem:[%s1039] sm:$0xff]
                  %1042 = vst [vmem:[%s1040] sm:$0xff] %v1041
                  %v1043 = vld [vmem:[%s1039 + $0x8] sm:$0xff]
                  %1044 = vst [vmem:[%s1040 + $0x8] sm:$0xff] %v1043
                  %v1045 = vld [vmem:[%s1039 + $0x10] sm:$0xff]
                  %1046 = vst [vmem:[%s1040 + $0x10] sm:$0xff] %v1045
                  %v1047 = vld [vmem:[%s1039 + $0x18] sm:$0xff]
                  %1048 = vst [vmem:[%s1040 + $0x18] sm:$0xff] %v1047
                  %v1049 = vld [vmem:[%s1039 + $0x20] sm:$0xff]
                  %1050 = vst [vmem:[%s1040 + $0x20] sm:$0xff] %v1049
                  %v1051 = vld [vmem:[%s1039 + $0x28] sm:$0xff]
                  %1052 = vst [vmem:[%s1040 + $0x28] sm:$0xff] %v1051
                  %v1053 = vld [vmem:[%s1039 + $0x30] sm:$0xff]
                  %1054 = vst [vmem:[%s1040 + $0x30] sm:$0xff] %v1053
                  %v1055 = vld [vmem:[%s1039 + $0x38] sm:$0xff]
                  %1056 = vst [vmem:[%s1040 + $0x38] sm:$0xff] %v1055
                  %v1057 = vld [vmem:[%s1039 + $0x40] sm:$0xff]
                  %1058 = vst [vmem:[%s1040 + $0x80] sm:$0xff] %v1057
                  %v1059 = vld [vmem:[%s1039 + $0x48] sm:$0xff]
                  %1060 = vst [vmem:[%s1040 + $0x88] sm:$0xff] %v1059
                  %v1061 = vld [vmem:[%s1039 + $0x50] sm:$0xff]
                  %1062 = vst [vmem:[%s1040 + $0x90] sm:$0xff] %v1061
                  %v1063 = vld [vmem:[%s1039 + $0x58] sm:$0xff]
                  %1064 = vst [vmem:[%s1040 + $0x98] sm:$0xff] %v1063
                  %v1065 = vld [vmem:[%s1039 + $0x60] sm:$0xff]
                  %1066 = vst [vmem:[%s1040 + $0xa0] sm:$0xff] %v1065
                  %v1067 = vld [vmem:[%s1039 + $0x68] sm:$0xff]
                  %1068 = vst [vmem:[%s1040 + $0xa8] sm:$0xff] %v1067
                  %v1069 = vld [vmem:[%s1039 + $0x70] sm:$0xff]
                  %1070 = vst [vmem:[%s1040 + $0xb0] sm:$0xff] %v1069
                  %v1071 = vld [vmem:[%s1039 + $0x78] sm:$0xff]
                  %1072 = vst [vmem:[%s1040 + $0xb8] sm:$0xff] %v1071
                  %v1073 = vld [vmem:[%s1039 + $0x80] sm:$0xff]
                  %1074 = vst [vmem:[%s1040 + $0x100] sm:$0xff] %v1073
                  %v1075 = vld [vmem:[%s1039 + $0x88] sm:$0xff]
                  %1076 = vst [vmem:[%s1040 + $0x108] sm:$0xff] %v1075
                  %v1077 = vld [vmem:[%s1039 + $0x90] sm:$0xff]
                  %1078 = vst [vmem:[%s1040 + $0x110] sm:$0xff] %v1077
                  %v1079 = vld [vmem:[%s1039 + $0x98] sm:$0xff]
                  %1080 = vst [vmem:[%s1040 + $0x118] sm:$0xff] %v1079
                  %v1081 = vld [vmem:[%s1039 + $0xa0] sm:$0xff]
                  %1082 = vst [vmem:[%s1040 + $0x120] sm:$0xff] %v1081
                  %v1083 = vld [vmem:[%s1039 + $0xa8] sm:$0xff]
                  %1084 = vst [vmem:[%s1040 + $0x128] sm:$0xff] %v1083
                  %v1085 = vld [vmem:[%s1039 + $0xb0] sm:$0xff]
                  %1086 = vst [vmem:[%s1040 + $0x130] sm:$0xff] %v1085
                  %v1087 = vld [vmem:[%s1039 + $0xb8] sm:$0xff]
                  %1088 = vst [vmem:[%s1040 + $0x138] sm:$0xff] %v1087
                  %v1089 = vld [vmem:[%s1039 + $0xc0] sm:$0xff]
                  %1090 = vst [vmem:[%s1040 + $0x180] sm:$0xff] %v1089
                  %v1091 = vld [vmem:[%s1039 + $0xc8] sm:$0xff]
                  %1092 = vst [vmem:[%s1040 + $0x188] sm:$0xff] %v1091
                  %v1093 = vld [vmem:[%s1039 + $0xd0] sm:$0xff]
                  %1094 = vst [vmem:[%s1040 + $0x190] sm:$0xff] %v1093
                  %v1095 = vld [vmem:[%s1039 + $0xd8] sm:$0xff]
                  %1096 = vst [vmem:[%s1040 + $0x198] sm:$0xff] %v1095
                  %v1097 = vld [vmem:[%s1039 + $0xe0] sm:$0xff]
                  %1098 = vst [vmem:[%s1040 + $0x1a0] sm:$0xff] %v1097
                  %v1099 = vld [vmem:[%s1039 + $0xe8] sm:$0xff]
                  %1100 = vst [vmem:[%s1040 + $0x1a8] sm:$0xff] %v1099
                  %v1101 = vld [vmem:[%s1039 + $0xf0] sm:$0xff]
                  %1102 = vst [vmem:[%s1040 + $0x1b0] sm:$0xff] %v1101
                  %v1103 = vld [vmem:[%s1039 + $0xf8] sm:$0xff]
                  %1104 = vst [vmem:[%s1040 + $0x1b8] sm:$0xff] %v1103
                $region114: #{_pair_math_device.1} parent=108 // loop_footer
                  %s1038 = sadd.s32 1, %s1034
                $region115: #{_pair_math_device.1} parent=108 // loop_footer_branch
                  %1033 = sbr.rel target = $region111
                $region116: #{_pair_math_device.1} parent=108 // loop_exit
                  _
              $region109: #{_pair_math_device.1} parent=93 // pred_fallthru
                _
              // Predicated region
              $region117: #{_pair_math_device.1} parent=93 // pred_check
                _
              $region118: #{_pair_math_device.1} parent=93 // pred_check_branch
                %1106 = sbr.rel target = $region120
              $region119: #{_pair_math_device.1} parent=93 // pred_region
                _
              $region120: #{_pair_math_device.1} parent=93 // pred_fallthru
                _
            $region94: #{_pair_math_device.1} parent=89 // pred_fallthru
              _
            // Predicated region
            $region95: #{_pair_math_device.1} parent=89 // pred_check
              _
            $region96: #{_pair_math_device.1} parent=89 // pred_check_branch
              %957 = sbr.rel target = $region98
            $region97: #{_pair_math_device.1} parent=89 // pred_region
              loop: start=0, step=1, limit=1
              $region99: #{_pair_math_device.1} parent=97 // loop_pre_header
                _
              $region100: #{_pair_math_device.1} parent=97 // loop_header
                %s960 = sphi 0, %s964
                %p961 = scmp.ge.s32.totalorder %s960, 1
                %s965 = sphi %s945, %s945
                %s966 = sphi %s951, %s951
              $region101: #{_pair_math_device.1} parent=97 // loop_header_branch
                %963 = sbr.rel (%p961) target = $region105
              $region102: #{_pair_math_device.1} parent=97 // loop_body
                %v967 = vld [vmem:[%s965] sm:$0xff]
                %968 = vst [vmem:[%s966] sm:$0xff] %v967
                %v969 = vld [vmem:[%s965 + $0x8] sm:$0xff]
                %970 = vst [vmem:[%s966 + $0x8] sm:$0xff] %v969
                %v971 = vld [vmem:[%s965 + $0x10] sm:$0xff]
                %972 = vst [vmem:[%s966 + $0x10] sm:$0xff] %v971
                %v973 = vld [vmem:[%s965 + $0x18] sm:$0xff]
                %974 = vst [vmem:[%s966 + $0x18] sm:$0xff] %v973
                %v975 = vld [vmem:[%s965 + $0x20] sm:$0xff]
                %976 = vst [vmem:[%s966 + $0x20] sm:$0xff] %v975
                %v977 = vld [vmem:[%s965 + $0x28] sm:$0xff]
                %978 = vst [vmem:[%s966 + $0x28] sm:$0xff] %v977
                %v979 = vld [vmem:[%s965 + $0x30] sm:$0xff]
                %980 = vst [vmem:[%s966 + $0x30] sm:$0xff] %v979
                %v981 = vld [vmem:[%s965 + $0x38] sm:$0xff]
                %982 = vst [vmem:[%s966 + $0x38] sm:$0xff] %v981
                %v983 = vld [vmem:[%s965 + $0x40] sm:$0xff]
                %984 = vst [vmem:[%s966 + $0x80] sm:$0xff] %v983
                %v985 = vld [vmem:[%s965 + $0x48] sm:$0xff]
                %986 = vst [vmem:[%s966 + $0x88] sm:$0xff] %v985
                %v987 = vld [vmem:[%s965 + $0x50] sm:$0xff]
                %988 = vst [vmem:[%s966 + $0x90] sm:$0xff] %v987
                %v989 = vld [vmem:[%s965 + $0x58] sm:$0xff]
                %990 = vst [vmem:[%s966 + $0x98] sm:$0xff] %v989
                %v991 = vld [vmem:[%s965 + $0x60] sm:$0xff]
                %992 = vst [vmem:[%s966 + $0xa0] sm:$0xff] %v991
                %v993 = vld [vmem:[%s965 + $0x68] sm:$0xff]
                %994 = vst [vmem:[%s966 + $0xa8] sm:$0xff] %v993
                %v995 = vld [vmem:[%s965 + $0x70] sm:$0xff]
                %996 = vst [vmem:[%s966 + $0xb0] sm:$0xff] %v995
                %v997 = vld [vmem:[%s965 + $0x78] sm:$0xff]
                %998 = vst [vmem:[%s966 + $0xb8] sm:$0xff] %v997
                %v999 = vld [vmem:[%s965 + $0x80] sm:$0xff]
                %1000 = vst [vmem:[%s966 + $0x100] sm:$0xff] %v999
                %v1001 = vld [vmem:[%s965 + $0x88] sm:$0xff]
                %1002 = vst [vmem:[%s966 + $0x108] sm:$0xff] %v1001
                %v1003 = vld [vmem:[%s965 + $0x90] sm:$0xff]
                %1004 = vst [vmem:[%s966 + $0x110] sm:$0xff] %v1003
                %v1005 = vld [vmem:[%s965 + $0x98] sm:$0xff]
                %1006 = vst [vmem:[%s966 + $0x118] sm:$0xff] %v1005
                %v1007 = vld [vmem:[%s965 + $0xa0] sm:$0xff]
                %1008 = vst [vmem:[%s966 + $0x120] sm:$0xff] %v1007
                %v1009 = vld [vmem:[%s965 + $0xa8] sm:$0xff]
                %1010 = vst [vmem:[%s966 + $0x128] sm:$0xff] %v1009
                %v1011 = vld [vmem:[%s965 + $0xb0] sm:$0xff]
                %1012 = vst [vmem:[%s966 + $0x130] sm:$0xff] %v1011
                %v1013 = vld [vmem:[%s965 + $0xb8] sm:$0xff]
                %1014 = vst [vmem:[%s966 + $0x138] sm:$0xff] %v1013
                %v1015 = vld [vmem:[%s965 + $0xc0] sm:$0xff]
                %1016 = vst [vmem:[%s966 + $0x180] sm:$0xff] %v1015
                %v1017 = vld [vmem:[%s965 + $0xc8] sm:$0xff]
                %1018 = vst [vmem:[%s966 + $0x188] sm:$0xff] %v1017
                %v1019 = vld [vmem:[%s965 + $0xd0] sm:$0xff]
                %1020 = vst [vmem:[%s966 + $0x190] sm:$0xff] %v1019
                %v1021 = vld [vmem:[%s965 + $0xd8] sm:$0xff]
                %1022 = vst [vmem:[%s966 + $0x198] sm:$0xff] %v1021
                %v1023 = vld [vmem:[%s965 + $0xe0] sm:$0xff]
                %1024 = vst [vmem:[%s966 + $0x1a0] sm:$0xff] %v1023
                %v1025 = vld [vmem:[%s965 + $0xe8] sm:$0xff]
                %1026 = vst [vmem:[%s966 + $0x1a8] sm:$0xff] %v1025
                %v1027 = vld [vmem:[%s965 + $0xf0] sm:$0xff]
                %1028 = vst [vmem:[%s966 + $0x1b0] sm:$0xff] %v1027
                %v1029 = vld [vmem:[%s965 + $0xf8] sm:$0xff]
                %1030 = vst [vmem:[%s966 + $0x1b8] sm:$0xff] %v1029
              $region103: #{_pair_math_device.1} parent=97 // loop_footer
                %s964 = sadd.s32 1, %s960
              $region104: #{_pair_math_device.1} parent=97 // loop_footer_branch
                %959 = sbr.rel target = $region100
              $region105: #{_pair_math_device.1} parent=97 // loop_exit
                _
            $region98: #{_pair_math_device.1} parent=89 // pred_fallthru
              _
          $region90: #{_pair_math_device.1} parent=85 // pred_fallthru
            _
          %1107 = vnop
        $region86: #{_pair_math_device.1} parent=69 // pred_fallthru
          _
      $region70: #{_pair_math_device.1} parent=5 // pred_fallthru
        _
      %p1108 = scmp.le.s32.totalorder 2, %s12
      // Predicated region
      $region121: #{_pair_math_device.1} parent=5 // pred_check
        %p1109 = pneg %p1108
      $region122: #{_pair_math_device.1} parent=5 // pred_check_branch
        %1111 = sbr.rel (%p1109) target = $region124
      $region123: #{_pair_math_device.1} parent=5 // pred_region
        %s1112 = ssub.s32 %s12, 2
        // Predicated region
        $region125: #{_pair_math_device.1} parent=123 // pred_check
          %p1113 = pneg %p135
        $region126: #{_pair_math_device.1} parent=123 // pred_check_branch
          %1115 = sbr.rel (%p1113) target = $region128
        $region127: #{_pair_math_device.1} parent=123 // pred_region
          %s1116 = sand.u32 %s120, 1
          %s1117 = sand.u32 %s120, 1
          %s1118 = smul.addr %s1117, 256
          %s1119 = scalar_lea.vmem [#allocation7], %s1118
        $region128: #{_pair_math_device.1} parent=123 // pred_fallthru
          _
      $region124: #{_pair_math_device.1} parent=5 // pred_fallthru
        _
    $region6: #{_pair_math_device.1} parent=1 // loop_footer
      %s16 = sadd.s32 1, %s12
    $region7: #{_pair_math_device.1} parent=1 // loop_footer_branch
      %11 = sbr.rel target = $region3
    $region8: #{_pair_math_device.1} parent=1 // loop_exit
      _
    %1120 = vsyncpa [#allocation3], 1
    %s1121 = scalar_lea.sflag [#allocation3], 1
    %1122 = vsyncpa %s1121, 1
    %1123 = vsyncpa [#allocation5], 1

</llo_original>
